<compile_context>
chip_gen: v7x
topology: tpu7x:2x2x1
jax: 0.10.0
libtpu: 0.0.40
codegen_flags: <defaults>
</compile_context>

<pallas_src>
import functools

import jax
import jax.numpy as jnp
from jax.experimental import pallas as pl
from jax.experimental.pallas import tpu as pltpu

EPS = 1e-5  # RevIN default eps


def tcn_revin_kernel(xf_ref, w1_ref, b1_ref, w2_ref, b2_ref, w3_ref, b3_ref,
                     wp_ref, bp_ref, out_ref, xn_ref, *, seq_len, pred_len,
                     enc_in):
    L, P, D = seq_len, pred_len, enc_in
    bt = xf_ref.shape[0]

    # ---- RevIN 'norm' stats: two-pass mean / biased var over time (f32) ----
    ssum = jnp.zeros((bt, D), jnp.float32)
    for l in range(L):
        ssum = ssum + xf_ref[:, pl.ds(l * D, D)]
    mean = ssum * (1.0 / L)

    ssq = jnp.zeros((bt, D), jnp.float32)
    for l in range(L):
        c = xf_ref[:, pl.ds(l * D, D)] - mean
        ssq = ssq + c * c
    var = ssq * (1.0 / L)                       # biased variance (RevIN)
    stdev = jnp.sqrt(var + EPS)
    inv_std = pl.reciprocal(stdev, approx=True)  # EUP, once on (bt, D)

    # ---- normalize: (x - mean) * inv_std; affine rw/rb folded into w1/b1 ----
    for l in range(L):
        sl = pl.ds(l * D, D)
        xn_ref[:, sl] = (xf_ref[:, sl] - mean) * inv_std

    # ---- MLP encoder + projection (bf16 MXU, f32 accumulate/elementwise) ----
    h = jnp.dot(xn_ref[...].astype(jnp.bfloat16), w1_ref[...],
                preferred_element_type=jnp.float32) + b1_ref[...]
    h = jnp.maximum(h, 0.0)
    h = jnp.dot(h.astype(jnp.bfloat16), w2_ref[...],
                preferred_element_type=jnp.float32) + b2_ref[...]
    h = jnp.maximum(h, 0.0)
    h = jnp.dot(h.astype(jnp.bfloat16), w3_ref[...],
                preferred_element_type=jnp.float32) + b3_ref[...]
    h = jnp.maximum(h, 0.0)
    pred = jnp.dot(h.astype(jnp.bfloat16), wp_ref[...],
                   preferred_element_type=jnp.float32) + bp_ref[...]

    # ---- RevIN 'denorm': out = pred * stdev + mean (affine folded in wp/bp) --
    out_ref[...] = pred
    for p in range(P):
        sl = pl.ds(p * D, D)
        out_ref[:, sl] = out_ref[:, sl] * stdev + mean
    # Padded columns [P*D, d_out_pad) stay zero and are sliced off in glue.


def make_params(key, enc_in, seq_len, pred_len):
    """Synthetic parameters with PyTorch nn.Linear-style init (f32, unfolded)."""
    d_in = enc_in * seq_len
    d_out = enc_in * pred_len
    dims = [(d_in, 512), (512, 256), (256, 128), (128, d_out)]
    names = ["1", "2", "3", "p"]
    keys = jax.random.split(key, 2 * len(dims) + 2)
    params = {}
    for i, ((fi, fo), name) in enumerate(zip(dims, names)):
        bound = 1.0 / jnp.sqrt(fi)
        params["w" + name] = jax.random.uniform(
            keys[2 * i], (fi, fo), jnp.float32, -bound, bound)
        params["b" + name] = jax.random.uniform(
            keys[2 * i + 1], (1, fo), jnp.float32, -bound, bound)
    # RevIN affine params (non-trivial values so the folding path is exercised).
    params["rw"] = jax.random.uniform(keys[-2], (1, enc_in), jnp.float32, 0.8, 1.2)
    params["rb"] = jax.random.uniform(keys[-1], (1, enc_in), jnp.float32, -0.1, 0.1)
    return params


def prepare_params(params, seq_len, pred_len, enc_in):
    """Fold RevIN affine into the first/last Linear layers, pad the output to a
    lane-dense width, cast MXU weights to bf16 (biases stay f32)."""
    L, P, D = seq_len, pred_len, enc_in
    rw, rb = params["rw"], params["rb"]                     # (1, D)

    # norm: x_norm = xhat * rw_f + rb_f  =>  fold into layer 1.
    rw_f = jnp.tile(rw, (1, L))                             # (1, L*D)
    rb_f = jnp.tile(rb, (1, L))
    w1 = params["w1"] * rw_f.T                              # scale rows of w1
    b1 = params["b1"] + rb_f @ params["w1"]

    # denorm: (pred - rb_p) / (rw_p + eps^2)  =>  fold into projection.
    rw_p = jnp.tile(rw, (1, P))                             # (1, P*D)
    rb_p = jnp.tile(rb, (1, P))
    inv_rw_p = 1.0 / (rw_p + EPS * EPS)
    wp = params["wp"] * inv_rw_p
    bp = (params["bp"] - rb_p) * inv_rw_p

    # lane-dense output: pad d_out up to a multiple of 128 with zero columns.
    d_out = P * D
    d_out_pad = ((d_out + 127) // 128) * 128
    pad = d_out_pad - d_out
    wp = jnp.pad(wp, ((0, 0), (0, pad)))
    bp = jnp.pad(bp, ((0, 0), (0, pad)))

    prepped = {
        "w1": w1.astype(jnp.bfloat16), "b1": b1.astype(jnp.float32),
        "w2": params["w2"].astype(jnp.bfloat16), "b2": params["b2"],
        "w3": params["w3"].astype(jnp.bfloat16), "b3": params["b3"],
        "wp": wp.astype(jnp.bfloat16), "bp": bp.astype(jnp.float32),
    }
    return prepped, d_out_pad


def _pick_batch_tile(B):
    for bt in (512, 256, 128, 64, 32, 16, 8):
        if B % bt == 0:
            return bt
    return B                                                # small B: full block


def _vmem_limit_bytes():
    # ~3/4 of physical VMEM, capped at 100 MiB (128 MiB v5e/v6e, 64 MiB v7x).
    try:
        cap = int(pltpu.get_tpu_info().vmem_capacity_bytes)
        return int(min(cap * 3 // 4, 100 * 1024 * 1024))
    except Exception:
        return 48 * 1024 * 1024


def tcn_revin_forward(x, prepped, d_out_pad, pred_len):
    B, L, D = x.shape
    d_in = L * D
    xf = x.reshape(B, d_in)            # same flatten as torch reshape(B, -1)
    bt = _pick_batch_tile(B)

    kernel = functools.partial(tcn_revin_kernel, seq_len=L, pred_len=pred_len,
                               enc_in=D)
    wspec = lambda shape: pl.BlockSpec(shape, lambda i: (0, 0))  # weight-resident

    out_flat = pl.pallas_call(
        kernel,
        out_shape=jax.ShapeDtypeStruct((B, d_out_pad), jnp.float32),
        grid=(B // bt,),
        in_specs=[
            pl.BlockSpec((bt, d_in), lambda i: (i, 0)),       # x (batch-tiled)
            wspec((d_in, 512)), wspec((1, 512)),              # layer 1 (folded)
            wspec((512, 256)), wspec((1, 256)),               # layer 2
            wspec((256, 128)), wspec((1, 128)),               # layer 3
            wspec((128, d_out_pad)), wspec((1, d_out_pad)),   # projection (folded, padded)
        ],
        out_specs=pl.BlockSpec((bt, d_out_pad), lambda i: (i, 0)),
        scratch_shapes=[pltpu.VMEM((bt, d_in), jnp.float32)],  # normalized activation
        compiler_params=pltpu.CompilerParams(
            dimension_semantics=("parallel",),
            vmem_limit_bytes=_vmem_limit_bytes(),
        ),
    )(xf, prepped["w1"], prepped["b1"], prepped["w2"], prepped["b2"],
      prepped["w3"], prepped["b3"], prepped["wp"], prepped["bp"])

    d_out = pred_len * D
    return out_flat[:, :d_out].reshape(B, pred_len, D)


def ref_forward(x, params, pred_len):
    """Pure-JAX f32 reference mirroring the PyTorch forward (unfolded params)."""
    B, L, D = x.shape
    mean = x.mean(axis=1, keepdims=True)
    var = ((x - mean) ** 2).mean(axis=1, keepdims=True)
    stdev = jnp.sqrt(var + EPS)
    xn = (x - mean) / stdev * params["rw"][0] + params["rb"][0]
    h = xn.reshape(B, L * D)
    h = jnp.maximum(h @ params["w1"] + params["b1"], 0.0)
    h = jnp.maximum(h @ params["w2"] + params["b2"], 0.0)
    h = jnp.maximum(h @ params["w3"] + params["b3"], 0.0)
    pred = (h @ params["wp"] + params["bp"]).reshape(B, pred_len, D)
    pred = (pred - params["rb"][0]) / (params["rw"][0] + EPS * EPS)
    pred = pred * stdev + mean
    return pred


if __name__ == "__main__":
    B, seq_len, enc_in, pred_len = 2, 16, 4, 8

    key = jax.random.PRNGKey(0)
    kx, kp = jax.random.split(key)
    x = jax.random.normal(kx, (B, seq_len, enc_in), jnp.float32)

    params = make_params(kp, enc_in, seq_len, pred_len)
    prepped, d_out_pad = prepare_params(params, seq_len, pred_len, enc_in)

    out = tcn_revin_forward(x, prepped, d_out_pad, pred_len)
    out = jax.block_until_ready(out)

    ref = ref_forward(x, params, pred_len)
    assert out.shape == (B, pred_len, enc_in)
    # bf16 MXU weights + approx reciprocal vs f32 reference -> loose tolerance.
    assert jnp.allclose(out, ref, rtol=3e-2, atol=3e-2), (
        "mismatch vs reference: max abs err = "
        f"{float(jnp.max(jnp.abs(out - ref)))}")

    print("KERNEL_OK")
</pallas_src>

<mosaic_0001>
module attributes {stable_mosaic.version = 11 : i64} {
  func.func @tcn_revin_kernel(%arg0: i32, %arg1: memref<2x64xf32, #tpu.memory_space<vmem>>, %arg2: memref<64x512xbf16, #tpu.memory_space<vmem>>, %arg3: memref<1x512xf32, #tpu.memory_space<vmem>>, %arg4: memref<512x256xbf16, #tpu.memory_space<vmem>>, %arg5: memref<1x256xf32, #tpu.memory_space<vmem>>, %arg6: memref<256x128xbf16, #tpu.memory_space<vmem>>, %arg7: memref<1x128xf32, #tpu.memory_space<vmem>>, %arg8: memref<128x128xbf16, #tpu.memory_space<vmem>>, %arg9: memref<1x128xf32, #tpu.memory_space<vmem>>, %arg10: memref<2x128xf32, #tpu.memory_space<vmem>>, %arg11: memref<2x64xf32, #tpu.memory_space<vmem>>) attributes {dimension_semantics = [#tpu.dimension_semantics<parallel>], iteration_bounds = array<i64: 1>, scalar_prefetch = 0 : i64, scratch_operands = 1 : i64, tpu.core_type = #tpu.core_type<tc>, window_params = [{transform_indices = @transform_0, window_bounds = array<i64: 2, 64>}, {pipeline_mode = #tpu.pipeline_mode<synchronous>, transform_indices = @transform_1, window_bounds = array<i64: 64, 512>}, {pipeline_mode = #tpu.pipeline_mode<synchronous>, transform_indices = @transform_2, window_bounds = array<i64: 1, 512>}, {pipeline_mode = #tpu.pipeline_mode<synchronous>, transform_indices = @transform_3, window_bounds = array<i64: 512, 256>}, {pipeline_mode = #tpu.pipeline_mode<synchronous>, transform_indices = @transform_4, window_bounds = array<i64: 1, 256>}, {pipeline_mode = #tpu.pipeline_mode<synchronous>, transform_indices = @transform_5, window_bounds = array<i64: 256, 128>}, {pipeline_mode = #tpu.pipeline_mode<synchronous>, transform_indices = @transform_6, window_bounds = array<i64: 1, 128>}, {pipeline_mode = #tpu.pipeline_mode<synchronous>, transform_indices = @transform_7, window_bounds = array<i64: 128, 128>}, {pipeline_mode = #tpu.pipeline_mode<synchronous>, transform_indices = @transform_8, window_bounds = array<i64: 1, 128>}, {transform_indices = @transform_9, window_bounds = array<i64: 2, 128>}]} {
    %cst = arith.constant 0.000000e+00 : f32
    %0 = vector.broadcast %cst : f32 to vector<2x4xf32>
    %c0 = arith.constant 0 : index
    %c0_0 = arith.constant 0 : index
    %1 = vector.load %arg1[%c0, %c0_0] : memref<2x64xf32, #tpu.memory_space<vmem>>, vector<2x4xf32>
    %2 = arith.addf %0, %1 : vector<2x4xf32>
    %c0_1 = arith.constant 0 : index
    %c4 = arith.constant 4 : index
    %3 = vector.load %arg1[%c0_1, %c4] : memref<2x64xf32, #tpu.memory_space<vmem>>, vector<2x4xf32>
    %4 = arith.addf %2, %3 : vector<2x4xf32>
    %c0_2 = arith.constant 0 : index
    %c8 = arith.constant 8 : index
    %5 = vector.load %arg1[%c0_2, %c8] : memref<2x64xf32, #tpu.memory_space<vmem>>, vector<2x4xf32>
    %6 = arith.addf %4, %5 : vector<2x4xf32>
    %c0_3 = arith.constant 0 : index
    %c12 = arith.constant 12 : index
    %7 = vector.load %arg1[%c0_3, %c12] : memref<2x64xf32, #tpu.memory_space<vmem>>, vector<2x4xf32>
    %8 = arith.addf %6, %7 : vector<2x4xf32>
    %c0_4 = arith.constant 0 : index
    %c16 = arith.constant 16 : index
    %9 = vector.load %arg1[%c0_4, %c16] : memref<2x64xf32, #tpu.memory_space<vmem>>, vector<2x4xf32>
    %10 = arith.addf %8, %9 : vector<2x4xf32>
    %c0_5 = arith.constant 0 : index
    %c20 = arith.constant 20 : index
    %11 = vector.load %arg1[%c0_5, %c20] : memref<2x64xf32, #tpu.memory_space<vmem>>, vector<2x4xf32>
    %12 = arith.addf %10, %11 : vector<2x4xf32>
    %c0_6 = arith.constant 0 : index
    %c24 = arith.constant 24 : index
    %13 = vector.load %arg1[%c0_6, %c24] : memref<2x64xf32, #tpu.memory_space<vmem>>, vector<2x4xf32>
    %14 = arith.addf %12, %13 : vector<2x4xf32>
    %c0_7 = arith.constant 0 : index
    %c28 = arith.constant 28 : index
    %15 = vector.load %arg1[%c0_7, %c28] : memref<2x64xf32, #tpu.memory_space<vmem>>, vector<2x4xf32>
    %16 = arith.addf %14, %15 : vector<2x4xf32>
    %c0_8 = arith.constant 0 : index
    %c32 = arith.constant 32 : index
    %17 = vector.load %arg1[%c0_8, %c32] : memref<2x64xf32, #tpu.memory_space<vmem>>, vector<2x4xf32>
    %18 = arith.addf %16, %17 : vector<2x4xf32>
    %c0_9 = arith.constant 0 : index
    %c36 = arith.constant 36 : index
    %19 = vector.load %arg1[%c0_9, %c36] : memref<2x64xf32, #tpu.memory_space<vmem>>, vector<2x4xf32>
    %20 = arith.addf %18, %19 : vector<2x4xf32>
    %c0_10 = arith.constant 0 : index
    %c40 = arith.constant 40 : index
    %21 = vector.load %arg1[%c0_10, %c40] : memref<2x64xf32, #tpu.memory_space<vmem>>, vector<2x4xf32>
    %22 = arith.addf %20, %21 : vector<2x4xf32>
    %c0_11 = arith.constant 0 : index
    %c44 = arith.constant 44 : index
    %23 = vector.load %arg1[%c0_11, %c44] : memref<2x64xf32, #tpu.memory_space<vmem>>, vector<2x4xf32>
    %24 = arith.addf %22, %23 : vector<2x4xf32>
    %c0_12 = arith.constant 0 : index
    %c48 = arith.constant 48 : index
    %25 = vector.load %arg1[%c0_12, %c48] : memref<2x64xf32, #tpu.memory_space<vmem>>, vector<2x4xf32>
    %26 = arith.addf %24, %25 : vector<2x4xf32>
    %c0_13 = arith.constant 0 : index
    %c52 = arith.constant 52 : index
    %27 = vector.load %arg1[%c0_13, %c52] : memref<2x64xf32, #tpu.memory_space<vmem>>, vector<2x4xf32>
    %28 = arith.addf %26, %27 : vector<2x4xf32>
    %c0_14 = arith.constant 0 : index
    %c56 = arith.constant 56 : index
    %29 = vector.load %arg1[%c0_14, %c56] : memref<2x64xf32, #tpu.memory_space<vmem>>, vector<2x4xf32>
    %30 = arith.addf %28, %29 : vector<2x4xf32>
    %c0_15 = arith.constant 0 : index
    %c60 = arith.constant 60 : index
    %31 = vector.load %arg1[%c0_15, %c60] : memref<2x64xf32, #tpu.memory_space<vmem>>, vector<2x4xf32>
    %32 = arith.addf %30, %31 : vector<2x4xf32>
    %cst_16 = arith.constant 6.250000e-02 : f32
    %33 = vector.broadcast %cst_16 : f32 to vector<2x4xf32>
    %34 = arith.mulf %32, %33 : vector<2x4xf32>
    %cst_17 = arith.constant 0.000000e+00 : f32
    %35 = vector.broadcast %cst_17 : f32 to vector<2x4xf32>
    %c0_18 = arith.constant 0 : index
    %c0_19 = arith.constant 0 : index
    %36 = vector.load %arg1[%c0_18, %c0_19] : memref<2x64xf32, #tpu.memory_space<vmem>>, vector<2x4xf32>
    %37 = arith.subf %36, %34 : vector<2x4xf32>
    %38 = arith.mulf %37, %37 : vector<2x4xf32>
    %39 = arith.addf %35, %38 : vector<2x4xf32>
    %c0_20 = arith.constant 0 : index
    %c4_21 = arith.constant 4 : index
    %40 = vector.load %arg1[%c0_20, %c4_21] : memref<2x64xf32, #tpu.memory_space<vmem>>, vector<2x4xf32>
    %41 = arith.subf %40, %34 : vector<2x4xf32>
    %42 = arith.mulf %41, %41 : vector<2x4xf32>
    %43 = arith.addf %39, %42 : vector<2x4xf32>
    %c0_22 = arith.constant 0 : index
    %c8_23 = arith.constant 8 : index
    %44 = vector.load %arg1[%c0_22, %c8_23] : memref<2x64xf32, #tpu.memory_space<vmem>>, vector<2x4xf32>
    %45 = arith.subf %44, %34 : vector<2x4xf32>
    %46 = arith.mulf %45, %45 : vector<2x4xf32>
    %47 = arith.addf %43, %46 : vector<2x4xf32>
    %c0_24 = arith.constant 0 : index
    %c12_25 = arith.constant 12 : index
    %48 = vector.load %arg1[%c0_24, %c12_25] : memref<2x64xf32, #tpu.memory_space<vmem>>, vector<2x4xf32>
    %49 = arith.subf %48, %34 : vector<2x4xf32>
    %50 = arith.mulf %49, %49 : vector<2x4xf32>
    %51 = arith.addf %47, %50 : vector<2x4xf32>
    %c0_26 = arith.constant 0 : index
    %c16_27 = arith.constant 16 : index
    %52 = vector.load %arg1[%c0_26, %c16_27] : memref<2x64xf32, #tpu.memory_space<vmem>>, vector<2x4xf32>
    %53 = arith.subf %52, %34 : vector<2x4xf32>
    %54 = arith.mulf %53, %53 : vector<2x4xf32>
    %55 = arith.addf %51, %54 : vector<2x4xf32>
    %c0_28 = arith.constant 0 : index
    %c20_29 = arith.constant 20 : index
    %56 = vector.load %arg1[%c0_28, %c20_29] : memref<2x64xf32, #tpu.memory_space<vmem>>, vector<2x4xf32>
    %57 = arith.subf %56, %34 : vector<2x4xf32>
    %58 = arith.mulf %57, %57 : vector<2x4xf32>
    %59 = arith.addf %55, %58 : vector<2x4xf32>
    %c0_30 = arith.constant 0 : index
    %c24_31 = arith.constant 24 : index
    %60 = vector.load %arg1[%c0_30, %c24_31] : memref<2x64xf32, #tpu.memory_space<vmem>>, vector<2x4xf32>
    %61 = arith.subf %60, %34 : vector<2x4xf32>
    %62 = arith.mulf %61, %61 : vector<2x4xf32>
    %63 = arith.addf %59, %62 : vector<2x4xf32>
    %c0_32 = arith.constant 0 : index
    %c28_33 = arith.constant 28 : index
    %64 = vector.load %arg1[%c0_32, %c28_33] : memref<2x64xf32, #tpu.memory_space<vmem>>, vector<2x4xf32>
    %65 = arith.subf %64, %34 : vector<2x4xf32>
    %66 = arith.mulf %65, %65 : vector<2x4xf32>
    %67 = arith.addf %63, %66 : vector<2x4xf32>
    %c0_34 = arith.constant 0 : index
    %c32_35 = arith.constant 32 : index
    %68 = vector.load %arg1[%c0_34, %c32_35] : memref<2x64xf32, #tpu.memory_space<vmem>>, vector<2x4xf32>
    %69 = arith.subf %68, %34 : vector<2x4xf32>
    %70 = arith.mulf %69, %69 : vector<2x4xf32>
    %71 = arith.addf %67, %70 : vector<2x4xf32>
    %c0_36 = arith.constant 0 : index
    %c36_37 = arith.constant 36 : index
    %72 = vector.load %arg1[%c0_36, %c36_37] : memref<2x64xf32, #tpu.memory_space<vmem>>, vector<2x4xf32>
    %73 = arith.subf %72, %34 : vector<2x4xf32>
    %74 = arith.mulf %73, %73 : vector<2x4xf32>
    %75 = arith.addf %71, %74 : vector<2x4xf32>
    %c0_38 = arith.constant 0 : index
    %c40_39 = arith.constant 40 : index
    %76 = vector.load %arg1[%c0_38, %c40_39] : memref<2x64xf32, #tpu.memory_space<vmem>>, vector<2x4xf32>
    %77 = arith.subf %76, %34 : vector<2x4xf32>
    %78 = arith.mulf %77, %77 : vector<2x4xf32>
    %79 = arith.addf %75, %78 : vector<2x4xf32>
    %c0_40 = arith.constant 0 : index
    %c44_41 = arith.constant 44 : index
    %80 = vector.load %arg1[%c0_40, %c44_41] : memref<2x64xf32, #tpu.memory_space<vmem>>, vector<2x4xf32>
    %81 = arith.subf %80, %34 : vector<2x4xf32>
    %82 = arith.mulf %81, %81 : vector<2x4xf32>
    %83 = arith.addf %79, %82 : vector<2x4xf32>
    %c0_42 = arith.constant 0 : index
    %c48_43 = arith.constant 48 : index
    %84 = vector.load %arg1[%c0_42, %c48_43] : memref<2x64xf32, #tpu.memory_space<vmem>>, vector<2x4xf32>
    %85 = arith.subf %84, %34 : vector<2x4xf32>
    %86 = arith.mulf %85, %85 : vector<2x4xf32>
    %87 = arith.addf %83, %86 : vector<2x4xf32>
    %c0_44 = arith.constant 0 : index
    %c52_45 = arith.constant 52 : index
    %88 = vector.load %arg1[%c0_44, %c52_45] : memref<2x64xf32, #tpu.memory_space<vmem>>, vector<2x4xf32>
    %89 = arith.subf %88, %34 : vector<2x4xf32>
    %90 = arith.mulf %89, %89 : vector<2x4xf32>
    %91 = arith.addf %87, %90 : vector<2x4xf32>
    %c0_46 = arith.constant 0 : index
    %c56_47 = arith.constant 56 : index
    %92 = vector.load %arg1[%c0_46, %c56_47] : memref<2x64xf32, #tpu.memory_space<vmem>>, vector<2x4xf32>
    %93 = arith.subf %92, %34 : vector<2x4xf32>
    %94 = arith.mulf %93, %93 : vector<2x4xf32>
    %95 = arith.addf %91, %94 : vector<2x4xf32>
    %c0_48 = arith.constant 0 : index
    %c60_49 = arith.constant 60 : index
    %96 = vector.load %arg1[%c0_48, %c60_49] : memref<2x64xf32, #tpu.memory_space<vmem>>, vector<2x4xf32>
    %97 = arith.subf %96, %34 : vector<2x4xf32>
    %98 = arith.mulf %97, %97 : vector<2x4xf32>
    %99 = arith.addf %95, %98 : vector<2x4xf32>
    %cst_50 = arith.constant 6.250000e-02 : f32
    %100 = vector.broadcast %cst_50 : f32 to vector<2x4xf32>
    %101 = arith.mulf %99, %100 : vector<2x4xf32>
    %cst_51 = arith.constant 9.99999974E-6 : f32
    %102 = vector.broadcast %cst_51 : f32 to vector<2x4xf32>
    %103 = arith.addf %101, %102 : vector<2x4xf32>
    %104 = math.sqrt %103 : vector<2x4xf32>
    %105 = tpu.reciprocal %104 {approx = true} : vector<2x4xf32> -> vector<2x4xf32>
    %c0_52 = arith.constant 0 : index
    %c0_53 = arith.constant 0 : index
    %106 = vector.load %arg1[%c0_52, %c0_53] : memref<2x64xf32, #tpu.memory_space<vmem>>, vector<2x4xf32>
    %107 = arith.subf %106, %34 : vector<2x4xf32>
    %108 = arith.mulf %107, %105 : vector<2x4xf32>
    %c0_54 = arith.constant 0 : index
    %c0_55 = arith.constant 0 : index
    %109 = vector.load %arg11[%c0_54, %c0_55] : memref<2x64xf32, #tpu.memory_space<vmem>>, vector<2x4xf32>
    tpu.vector_store %arg11[%c0_54, %c0_55], %108 {strides = array<i32>} : memref<2x64xf32, #tpu.memory_space<vmem>>, vector<2x4xf32>,
    %c0_56 = arith.constant 0 : index
    %c4_57 = arith.constant 4 : index
    %110 = vector.load %arg1[%c0_56, %c4_57] : memref<2x64xf32, #tpu.memory_space<vmem>>, vector<2x4xf32>
    %111 = arith.subf %110, %34 : vector<2x4xf32>
    %112 = arith.mulf %111, %105 : vector<2x4xf32>
    %c0_58 = arith.constant 0 : index
    %c4_59 = arith.constant 4 : index
    %113 = vector.load %arg11[%c0_58, %c4_59] : memref<2x64xf32, #tpu.memory_space<vmem>>, vector<2x4xf32>
    tpu.vector_store %arg11[%c0_58, %c4_59], %112 {strides = array<i32>} : memref<2x64xf32, #tpu.memory_space<vmem>>, vector<2x4xf32>,
    %c0_60 = arith.constant 0 : index
    %c8_61 = arith.constant 8 : index
    %114 = vector.load %arg1[%c0_60, %c8_61] : memref<2x64xf32, #tpu.memory_space<vmem>>, vector<2x4xf32>
    %115 = arith.subf %114, %34 : vector<2x4xf32>
    %116 = arith.mulf %115, %105 : vector<2x4xf32>
    %c0_62 = arith.constant 0 : index
    %c8_63 = arith.constant 8 : index
    %117 = vector.load %arg11[%c0_62, %c8_63] : memref<2x64xf32, #tpu.memory_space<vmem>>, vector<2x4xf32>
    tpu.vector_store %arg11[%c0_62, %c8_63], %116 {strides = array<i32>} : memref<2x64xf32, #tpu.memory_space<vmem>>, vector<2x4xf32>,
    %c0_64 = arith.constant 0 : index
    %c12_65 = arith.constant 12 : index
    %118 = vector.load %arg1[%c0_64, %c12_65] : memref<2x64xf32, #tpu.memory_space<vmem>>, vector<2x4xf32>
    %119 = arith.subf %118, %34 : vector<2x4xf32>
    %120 = arith.mulf %119, %105 : vector<2x4xf32>
    %c0_66 = arith.constant 0 : index
    %c12_67 = arith.constant 12 : index
    %121 = vector.load %arg11[%c0_66, %c12_67] : memref<2x64xf32, #tpu.memory_space<vmem>>, vector<2x4xf32>
    tpu.vector_store %arg11[%c0_66, %c12_67], %120 {strides = array<i32>} : memref<2x64xf32, #tpu.memory_space<vmem>>, vector<2x4xf32>,
    %c0_68 = arith.constant 0 : index
    %c16_69 = arith.constant 16 : index
    %122 = vector.load %arg1[%c0_68, %c16_69] : memref<2x64xf32, #tpu.memory_space<vmem>>, vector<2x4xf32>
    %123 = arith.subf %122, %34 : vector<2x4xf32>
    %124 = arith.mulf %123, %105 : vector<2x4xf32>
    %c0_70 = arith.constant 0 : index
    %c16_71 = arith.constant 16 : index
    %125 = vector.load %arg11[%c0_70, %c16_71] : memref<2x64xf32, #tpu.memory_space<vmem>>, vector<2x4xf32>
    tpu.vector_store %arg11[%c0_70, %c16_71], %124 {strides = array<i32>} : memref<2x64xf32, #tpu.memory_space<vmem>>, vector<2x4xf32>,
    %c0_72 = arith.constant 0 : index
    %c20_73 = arith.constant 20 : index
    %126 = vector.load %arg1[%c0_72, %c20_73] : memref<2x64xf32, #tpu.memory_space<vmem>>, vector<2x4xf32>
    %127 = arith.subf %126, %34 : vector<2x4xf32>
    %128 = arith.mulf %127, %105 : vector<2x4xf32>
    %c0_74 = arith.constant 0 : index
    %c20_75 = arith.constant 20 : index
    %129 = vector.load %arg11[%c0_74, %c20_75] : memref<2x64xf32, #tpu.memory_space<vmem>>, vector<2x4xf32>
    tpu.vector_store %arg11[%c0_74, %c20_75], %128 {strides = array<i32>} : memref<2x64xf32, #tpu.memory_space<vmem>>, vector<2x4xf32>,
    %c0_76 = arith.constant 0 : index
    %c24_77 = arith.constant 24 : index
    %130 = vector.load %arg1[%c0_76, %c24_77] : memref<2x64xf32, #tpu.memory_space<vmem>>, vector<2x4xf32>
    %131 = arith.subf %130, %34 : vector<2x4xf32>
    %132 = arith.mulf %131, %105 : vector<2x4xf32>
    %c0_78 = arith.constant 0 : index
    %c24_79 = arith.constant 24 : index
    %133 = vector.load %arg11[%c0_78, %c24_79] : memref<2x64xf32, #tpu.memory_space<vmem>>, vector<2x4xf32>
    tpu.vector_store %arg11[%c0_78, %c24_79], %132 {strides = array<i32>} : memref<2x64xf32, #tpu.memory_space<vmem>>, vector<2x4xf32>,
    %c0_80 = arith.constant 0 : index
    %c28_81 = arith.constant 28 : index
    %134 = vector.load %arg1[%c0_80, %c28_81] : memref<2x64xf32, #tpu.memory_space<vmem>>, vector<2x4xf32>
    %135 = arith.subf %134, %34 : vector<2x4xf32>
    %136 = arith.mulf %135, %105 : vector<2x4xf32>
    %c0_82 = arith.constant 0 : index
    %c28_83 = arith.constant 28 : index
    %137 = vector.load %arg11[%c0_82, %c28_83] : memref<2x64xf32, #tpu.memory_space<vmem>>, vector<2x4xf32>
    tpu.vector_store %arg11[%c0_82, %c28_83], %136 {strides = array<i32>} : memref<2x64xf32, #tpu.memory_space<vmem>>, vector<2x4xf32>,
    %c0_84 = arith.constant 0 : index
    %c32_85 = arith.constant 32 : index
    %138 = vector.load %arg1[%c0_84, %c32_85] : memref<2x64xf32, #tpu.memory_space<vmem>>, vector<2x4xf32>
    %139 = arith.subf %138, %34 : vector<2x4xf32>
    %140 = arith.mulf %139, %105 : vector<2x4xf32>
    %c0_86 = arith.constant 0 : index
    %c32_87 = arith.constant 32 : index
    %141 = vector.load %arg11[%c0_86, %c32_87] : memref<2x64xf32, #tpu.memory_space<vmem>>, vector<2x4xf32>
    tpu.vector_store %arg11[%c0_86, %c32_87], %140 {strides = array<i32>} : memref<2x64xf32, #tpu.memory_space<vmem>>, vector<2x4xf32>,
    %c0_88 = arith.constant 0 : index
    %c36_89 = arith.constant 36 : index
    %142 = vector.load %arg1[%c0_88, %c36_89] : memref<2x64xf32, #tpu.memory_space<vmem>>, vector<2x4xf32>
    %143 = arith.subf %142, %34 : vector<2x4xf32>
    %144 = arith.mulf %143, %105 : vector<2x4xf32>
    %c0_90 = arith.constant 0 : index
    %c36_91 = arith.constant 36 : index
    %145 = vector.load %arg11[%c0_90, %c36_91] : memref<2x64xf32, #tpu.memory_space<vmem>>, vector<2x4xf32>
    tpu.vector_store %arg11[%c0_90, %c36_91], %144 {strides = array<i32>} : memref<2x64xf32, #tpu.memory_space<vmem>>, vector<2x4xf32>,
    %c0_92 = arith.constant 0 : index
    %c40_93 = arith.constant 40 : index
    %146 = vector.load %arg1[%c0_92, %c40_93] : memref<2x64xf32, #tpu.memory_space<vmem>>, vector<2x4xf32>
    %147 = arith.subf %146, %34 : vector<2x4xf32>
    %148 = arith.mulf %147, %105 : vector<2x4xf32>
    %c0_94 = arith.constant 0 : index
    %c40_95 = arith.constant 40 : index
    %149 = vector.load %arg11[%c0_94, %c40_95] : memref<2x64xf32, #tpu.memory_space<vmem>>, vector<2x4xf32>
    tpu.vector_store %arg11[%c0_94, %c40_95], %148 {strides = array<i32>} : memref<2x64xf32, #tpu.memory_space<vmem>>, vector<2x4xf32>,
    %c0_96 = arith.constant 0 : index
    %c44_97 = arith.constant 44 : index
    %150 = vector.load %arg1[%c0_96, %c44_97] : memref<2x64xf32, #tpu.memory_space<vmem>>, vector<2x4xf32>
    %151 = arith.subf %150, %34 : vector<2x4xf32>
    %152 = arith.mulf %151, %105 : vector<2x4xf32>
    %c0_98 = arith.constant 0 : index
    %c44_99 = arith.constant 44 : index
    %153 = vector.load %arg11[%c0_98, %c44_99] : memref<2x64xf32, #tpu.memory_space<vmem>>, vector<2x4xf32>
    tpu.vector_store %arg11[%c0_98, %c44_99], %152 {strides = array<i32>} : memref<2x64xf32, #tpu.memory_space<vmem>>, vector<2x4xf32>,
    %c0_100 = arith.constant 0 : index
    %c48_101 = arith.constant 48 : index
    %154 = vector.load %arg1[%c0_100, %c48_101] : memref<2x64xf32, #tpu.memory_space<vmem>>, vector<2x4xf32>
    %155 = arith.subf %154, %34 : vector<2x4xf32>
    %156 = arith.mulf %155, %105 : vector<2x4xf32>
    %c0_102 = arith.constant 0 : index
    %c48_103 = arith.constant 48 : index
    %157 = vector.load %arg11[%c0_102, %c48_103] : memref<2x64xf32, #tpu.memory_space<vmem>>, vector<2x4xf32>
    tpu.vector_store %arg11[%c0_102, %c48_103], %156 {strides = array<i32>} : memref<2x64xf32, #tpu.memory_space<vmem>>, vector<2x4xf32>,
    %c0_104 = arith.constant 0 : index
    %c52_105 = arith.constant 52 : index
    %158 = vector.load %arg1[%c0_104, %c52_105] : memref<2x64xf32, #tpu.memory_space<vmem>>, vector<2x4xf32>
    %159 = arith.subf %158, %34 : vector<2x4xf32>
    %160 = arith.mulf %159, %105 : vector<2x4xf32>
    %c0_106 = arith.constant 0 : index
    %c52_107 = arith.constant 52 : index
    %161 = vector.load %arg11[%c0_106, %c52_107] : memref<2x64xf32, #tpu.memory_space<vmem>>, vector<2x4xf32>
    tpu.vector_store %arg11[%c0_106, %c52_107], %160 {strides = array<i32>} : memref<2x64xf32, #tpu.memory_space<vmem>>, vector<2x4xf32>,
    %c0_108 = arith.constant 0 : index
    %c56_109 = arith.constant 56 : index
    %162 = vector.load %arg1[%c0_108, %c56_109] : memref<2x64xf32, #tpu.memory_space<vmem>>, vector<2x4xf32>
    %163 = arith.subf %162, %34 : vector<2x4xf32>
    %164 = arith.mulf %163, %105 : vector<2x4xf32>
    %c0_110 = arith.constant 0 : index
    %c56_111 = arith.constant 56 : index
    %165 = vector.load %arg11[%c0_110, %c56_111] : memref<2x64xf32, #tpu.memory_space<vmem>>, vector<2x4xf32>
    tpu.vector_store %arg11[%c0_110, %c56_111], %164 {strides = array<i32>} : memref<2x64xf32, #tpu.memory_space<vmem>>, vector<2x4xf32>,
    %c0_112 = arith.constant 0 : index
    %c60_113 = arith.constant 60 : index
    %166 = vector.load %arg1[%c0_112, %c60_113] : memref<2x64xf32, #tpu.memory_space<vmem>>, vector<2x4xf32>
    %167 = arith.subf %166, %34 : vector<2x4xf32>
    %168 = arith.mulf %167, %105 : vector<2x4xf32>
    %c0_114 = arith.constant 0 : index
    %c60_115 = arith.constant 60 : index
    %169 = vector.load %arg11[%c0_114, %c60_115] : memref<2x64xf32, #tpu.memory_space<vmem>>, vector<2x4xf32>
    tpu.vector_store %arg11[%c0_114, %c60_115], %168 {strides = array<i32>} : memref<2x64xf32, #tpu.memory_space<vmem>>, vector<2x4xf32>,
    %c0_116 = arith.constant 0 : index
    %c0_117 = arith.constant 0 : index
    %170 = vector.load %arg11[%c0_116, %c0_117] : memref<2x64xf32, #tpu.memory_space<vmem>>, vector<2x64xf32>
    %171 = arith.truncf %170 : vector<2x64xf32> to vector<2x64xbf16>
    %c0_118 = arith.constant 0 : index
    %c0_119 = arith.constant 0 : index
    %172 = vector.load %arg2[%c0_118, %c0_119] : memref<64x512xbf16, #tpu.memory_space<vmem>>, vector<64x512xbf16>
    %cst_120 = arith.constant dense<0.000000e+00> : vector<2x512xf32>
    %173 = tpu.matmul %171, %172, %cst_120 {dimension_numbers = #tpu.dot_dimension_numbers<[1], [0], [0], [1], [0, 0, 1, 1], [], []>} : vector<2x64xbf16>, vector<64x512xbf16>, vector<2x512xf32> -> vector<2x512xf32>
    %c0_121 = arith.constant 0 : index
    %c0_122 = arith.constant 0 : index
    %174 = vector.load %arg3[%c0_121, %c0_122] : memref<1x512xf32, #tpu.memory_space<vmem>>, vector<1x512xf32>
    %175 = vector.broadcast %174 : vector<1x512xf32> to vector<2x512xf32>
    %176 = arith.addf %173, %175 : vector<2x512xf32>
    %cst_123 = arith.constant 0.000000e+00 : f32
    %177 = vector.broadcast %cst_123 : f32 to vector<2x512xf32>
    %178 = arith.maximumf %176, %177 : vector<2x512xf32>
    %179 = arith.truncf %178 : vector<2x512xf32> to vector<2x512xbf16>
    %c0_124 = arith.constant 0 : index
    %c0_125 = arith.constant 0 : index
    %180 = vector.load %arg4[%c0_124, %c0_125] : memref<512x256xbf16, #tpu.memory_space<vmem>>, vector<512x256xbf16>
    %cst_126 = arith.constant dense<0.000000e+00> : vector<2x256xf32>
    %181 = tpu.matmul %179, %180, %cst_126 {dimension_numbers = #tpu.dot_dimension_numbers<[1], [0], [0], [1], [0, 0, 1, 1], [], []>} : vector<2x512xbf16>, vector<512x256xbf16>, vector<2x256xf32> -> vector<2x256xf32>
    %c0_127 = arith.constant 0 : index
    %c0_128 = arith.constant 0 : index
    %182 = vector.load %arg5[%c0_127, %c0_128] : memref<1x256xf32, #tpu.memory_space<vmem>>, vector<1x256xf32>
    %183 = vector.broadcast %182 : vector<1x256xf32> to vector<2x256xf32>
    %184 = arith.addf %181, %183 : vector<2x256xf32>
    %cst_129 = arith.constant 0.000000e+00 : f32
    %185 = vector.broadcast %cst_129 : f32 to vector<2x256xf32>
    %186 = arith.maximumf %184, %185 : vector<2x256xf32>
    %187 = arith.truncf %186 : vector<2x256xf32> to vector<2x256xbf16>
    %c0_130 = arith.constant 0 : index
    %c0_131 = arith.constant 0 : index
    %188 = vector.load %arg6[%c0_130, %c0_131] : memref<256x128xbf16, #tpu.memory_space<vmem>>, vector<256x128xbf16>
    %cst_132 = arith.constant dense<0.000000e+00> : vector<2x128xf32>
    %189 = tpu.matmul %187, %188, %cst_132 {dimension_numbers = #tpu.dot_dimension_numbers<[1], [0], [0], [1], [0, 0, 1, 1], [], []>} : vector<2x256xbf16>, vector<256x128xbf16>, vector<2x128xf32> -> vector<2x128xf32>
    %c0_133 = arith.constant 0 : index
    %c0_134 = arith.constant 0 : index
    %190 = vector.load %arg7[%c0_133, %c0_134] : memref<1x128xf32, #tpu.memory_space<vmem>>, vector<1x128xf32>
    %191 = vector.broadcast %190 : vector<1x128xf32> to vector<2x128xf32>
    %192 = arith.addf %189, %191 : vector<2x128xf32>
    %cst_135 = arith.constant 0.000000e+00 : f32
    %193 = vector.broadcast %cst_135 : f32 to vector<2x128xf32>
    %194 = arith.maximumf %192, %193 : vector<2x128xf32>
    %195 = arith.truncf %194 : vector<2x128xf32> to vector<2x128xbf16>
    %c0_136 = arith.constant 0 : index
    %c0_137 = arith.constant 0 : index
    %196 = vector.load %arg8[%c0_136, %c0_137] : memref<128x128xbf16, #tpu.memory_space<vmem>>, vector<128x128xbf16>
    %cst_138 = arith.constant dense<0.000000e+00> : vector<2x128xf32>
    %197 = tpu.matmul %195, %196, %cst_138 {dimension_numbers = #tpu.dot_dimension_numbers<[1], [0], [0], [1], [0, 0, 1, 1], [], []>} : vector<2x128xbf16>, vector<128x128xbf16>, vector<2x128xf32> -> vector<2x128xf32>
    %c0_139 = arith.constant 0 : index
    %c0_140 = arith.constant 0 : index
    %198 = vector.load %arg9[%c0_139, %c0_140] : memref<1x128xf32, #tpu.memory_space<vmem>>, vector<1x128xf32>
    %199 = vector.broadcast %198 : vector<1x128xf32> to vector<2x128xf32>
    %200 = arith.addf %197, %199 : vector<2x128xf32>
    %c0_141 = arith.constant 0 : index
    %c0_142 = arith.constant 0 : index
    %201 = vector.load %arg10[%c0_141, %c0_142] : memref<2x128xf32, #tpu.memory_space<vmem>>, vector<2x128xf32>
    tpu.vector_store %arg10[%c0_141, %c0_142], %200 {strides = array<i32>} : memref<2x128xf32, #tpu.memory_space<vmem>>, vector<2x128xf32>,
    %c0_143 = arith.constant 0 : index
    %c0_144 = arith.constant 0 : index
    %202 = vector.load %arg10[%c0_143, %c0_144] : memref<2x128xf32, #tpu.memory_space<vmem>>, vector<2x4xf32>
    %203 = arith.mulf %202, %104 : vector<2x4xf32>
    %204 = arith.addf %203, %34 : vector<2x4xf32>
    %c0_145 = arith.constant 0 : index
    %c0_146 = arith.constant 0 : index
    %205 = vector.load %arg10[%c0_145, %c0_146] : memref<2x128xf32, #tpu.memory_space<vmem>>, vector<2x4xf32>
    tpu.vector_store %arg10[%c0_145, %c0_146], %204 {strides = array<i32>} : memref<2x128xf32, #tpu.memory_space<vmem>>, vector<2x4xf32>,
    %c0_147 = arith.constant 0 : index
    %c4_148 = arith.constant 4 : index
    %206 = vector.load %arg10[%c0_147, %c4_148] : memref<2x128xf32, #tpu.memory_space<vmem>>, vector<2x4xf32>
    %207 = arith.mulf %206, %104 : vector<2x4xf32>
    %208 = arith.addf %207, %34 : vector<2x4xf32>
    %c0_149 = arith.constant 0 : index
    %c4_150 = arith.constant 4 : index
    %209 = vector.load %arg10[%c0_149, %c4_150] : memref<2x128xf32, #tpu.memory_space<vmem>>, vector<2x4xf32>
    tpu.vector_store %arg10[%c0_149, %c4_150], %208 {strides = array<i32>} : memref<2x128xf32, #tpu.memory_space<vmem>>, vector<2x4xf32>,
    %c0_151 = arith.constant 0 : index
    %c8_152 = arith.constant 8 : index
    %210 = vector.load %arg10[%c0_151, %c8_152] : memref<2x128xf32, #tpu.memory_space<vmem>>, vector<2x4xf32>
    %211 = arith.mulf %210, %104 : vector<2x4xf32>
    %212 = arith.addf %211, %34 : vector<2x4xf32>
    %c0_153 = arith.constant 0 : index
    %c8_154 = arith.constant 8 : index
    %213 = vector.load %arg10[%c0_153, %c8_154] : memref<2x128xf32, #tpu.memory_space<vmem>>, vector<2x4xf32>
    tpu.vector_store %arg10[%c0_153, %c8_154], %212 {strides = array<i32>} : memref<2x128xf32, #tpu.memory_space<vmem>>, vector<2x4xf32>,
    %c0_155 = arith.constant 0 : index
    %c12_156 = arith.constant 12 : index
    %214 = vector.load %arg10[%c0_155, %c12_156] : memref<2x128xf32, #tpu.memory_space<vmem>>, vector<2x4xf32>
    %215 = arith.mulf %214, %104 : vector<2x4xf32>
    %216 = arith.addf %215, %34 : vector<2x4xf32>
    %c0_157 = arith.constant 0 : index
    %c12_158 = arith.constant 12 : index
    %217 = vector.load %arg10[%c0_157, %c12_158] : memref<2x128xf32, #tpu.memory_space<vmem>>, vector<2x4xf32>
    tpu.vector_store %arg10[%c0_157, %c12_158], %216 {strides = array<i32>} : memref<2x128xf32, #tpu.memory_space<vmem>>, vector<2x4xf32>,
    %c0_159 = arith.constant 0 : index
    %c16_160 = arith.constant 16 : index
    %218 = vector.load %arg10[%c0_159, %c16_160] : memref<2x128xf32, #tpu.memory_space<vmem>>, vector<2x4xf32>
    %219 = arith.mulf %218, %104 : vector<2x4xf32>
    %220 = arith.addf %219, %34 : vector<2x4xf32>
    %c0_161 = arith.constant 0 : index
    %c16_162 = arith.constant 16 : index
    %221 = vector.load %arg10[%c0_161, %c16_162] : memref<2x128xf32, #tpu.memory_space<vmem>>, vector<2x4xf32>
    tpu.vector_store %arg10[%c0_161, %c16_162], %220 {strides = array<i32>} : memref<2x128xf32, #tpu.memory_space<vmem>>, vector<2x4xf32>,
    %c0_163 = arith.constant 0 : index
    %c20_164 = arith.constant 20 : index
    %222 = vector.load %arg10[%c0_163, %c20_164] : memref<2x128xf32, #tpu.memory_space<vmem>>, vector<2x4xf32>
    %223 = arith.mulf %222, %104 : vector<2x4xf32>
    %224 = arith.addf %223, %34 : vector<2x4xf32>
    %c0_165 = arith.constant 0 : index
    %c20_166 = arith.constant 20 : index
    %225 = vector.load %arg10[%c0_165, %c20_166] : memref<2x128xf32, #tpu.memory_space<vmem>>, vector<2x4xf32>
    tpu.vector_store %arg10[%c0_165, %c20_166], %224 {strides = array<i32>} : memref<2x128xf32, #tpu.memory_space<vmem>>, vector<2x4xf32>,
    %c0_167 = arith.constant 0 : index
    %c24_168 = arith.constant 24 : index
    %226 = vector.load %arg10[%c0_167, %c24_168] : memref<2x128xf32, #tpu.memory_space<vmem>>, vector<2x4xf32>
    %227 = arith.mulf %226, %104 : vector<2x4xf32>
    %228 = arith.addf %227, %34 : vector<2x4xf32>
    %c0_169 = arith.constant 0 : index
    %c24_170 = arith.constant 24 : index
    %229 = vector.load %arg10[%c0_169, %c24_170] : memref<2x128xf32, #tpu.memory_space<vmem>>, vector<2x4xf32>
    tpu.vector_store %arg10[%c0_169, %c24_170], %228 {strides = array<i32>} : memref<2x128xf32, #tpu.memory_space<vmem>>, vector<2x4xf32>,
    %c0_171 = arith.constant 0 : index
    %c28_172 = arith.constant 28 : index
    %230 = vector.load %arg10[%c0_171, %c28_172] : memref<2x128xf32, #tpu.memory_space<vmem>>, vector<2x4xf32>
    %231 = arith.mulf %230, %104 : vector<2x4xf32>
    %232 = arith.addf %231, %34 : vector<2x4xf32>
    %c0_173 = arith.constant 0 : index
    %c28_174 = arith.constant 28 : index
    %233 = vector.load %arg10[%c0_173, %c28_174] : memref<2x128xf32, #tpu.memory_space<vmem>>, vector<2x4xf32>
    tpu.vector_store %arg10[%c0_173, %c28_174], %232 {strides = array<i32>} : memref<2x128xf32, #tpu.memory_space<vmem>>, vector<2x4xf32>,
    return
  }
  func.func @transform_0(%arg0: i32) -> (i32, i32) {
    %c0_i32 = arith.constant 0 : i32
    %c0_i32_0 = arith.constant 0 : i32
    return %arg0, %c0_i32 : i32, i32
  }
  func.func @transform_1(%arg0: i32) -> (i32, i32) {
    %c0_i32 = arith.constant 0 : i32
    %c0_i32_0 = arith.constant 0 : i32
    %c0_i32_1 = arith.constant 0 : i32
    return %c0_i32, %c0_i32_0 : i32, i32
  }
  func.func @transform_2(%arg0: i32) -> (i32, i32) {
    %c0_i32 = arith.constant 0 : i32
    %c0_i32_0 = arith.constant 0 : i32
    %c0_i32_1 = arith.constant 0 : i32
    return %c0_i32, %c0_i32_0 : i32, i32
  }
  func.func @transform_3(%arg0: i32) -> (i32, i32) {
    %c0_i32 = arith.constant 0 : i32
    %c0_i32_0 = arith.constant 0 : i32
    %c0_i32_1 = arith.constant 0 : i32
    return %c0_i32, %c0_i32_0 : i32, i32
  }
  func.func @transform_4(%arg0: i32) -> (i32, i32) {
    %c0_i32 = arith.constant 0 : i32
    %c0_i32_0 = arith.constant 0 : i32
    %c0_i32_1 = arith.constant 0 : i32
    return %c0_i32, %c0_i32_0 : i32, i32
  }
  func.func @transform_5(%arg0: i32) -> (i32, i32) {
    %c0_i32 = arith.constant 0 : i32
    %c0_i32_0 = arith.constant 0 : i32
    %c0_i32_1 = arith.constant 0 : i32
    return %c0_i32, %c0_i32_0 : i32, i32
  }
  func.func @transform_6(%arg0: i32) -> (i32, i32) {
    %c0_i32 = arith.constant 0 : i32
    %c0_i32_0 = arith.constant 0 : i32
    %c0_i32_1 = arith.constant 0 : i32
    return %c0_i32, %c0_i32_0 : i32, i32
  }
  func.func @transform_7(%arg0: i32) -> (i32, i32) {
    %c0_i32 = arith.constant 0 : i32
    %c0_i32_0 = arith.constant 0 : i32
    %c0_i32_1 = arith.constant 0 : i32
    return %c0_i32, %c0_i32_0 : i32, i32
  }
  func.func @transform_8(%arg0: i32) -> (i32, i32) {
    %c0_i32 = arith.constant 0 : i32
    %c0_i32_0 = arith.constant 0 : i32
    %c0_i32_1 = arith.constant 0 : i32
    return %c0_i32, %c0_i32_0 : i32, i32
  }
  func.func @transform_9(%arg0: i32) -> (i32, i32) {
    %c0_i32 = arith.constant 0 : i32
    %c0_i32_0 = arith.constant 0 : i32
    return %arg0, %c0_i32 : i32, i32
  }
}

</mosaic_0001>

<llo_original>
// kernel: tpu_custom_call.1
$region0: #{tpu_custom_call.1}
  #allocation0 [shape = 'u32[]', space=smem, size = 0x4, offset = 0x4, fixed_abs, tag = 'smem constant byte address 0x4 - core index']
  #allocation1 [shape = 'u32[144,128]{1,0:T(1,128)}', space=vmem, size = 0x12000, scoped, tag = 'internal scratch']
  #allocation2 [shape = 'f32[2,64]{1,0:T(2,128)}', space=vmem, size = 0x400, scoped, tag = 'scratch operand']
  %s0 = inlined_call_operand.hbm [shape: f32[2,64], index: 0, kind: input, shape index: {}]
  %s1 = inlined_call_operand.hbm [shape: bf16[64,512], index: 1, kind: input, shape index: {}]
  %s2 = inlined_call_operand.vmem [shape: f32[1,512], index: 2, kind: input, shape index: {}]
  %s3 = inlined_call_operand.hbm [shape: bf16[512,256], index: 3, kind: input, shape index: {}]
  %s4 = inlined_call_operand.vmem [shape: f32[1,256], index: 4, kind: input, shape index: {}]
  %s5 = inlined_call_operand.hbm [shape: bf16[256,128], index: 5, kind: input, shape index: {}]
  %s6 = inlined_call_operand.vmem [shape: f32[1,128], index: 6, kind: input, shape index: {}]
  %s7 = inlined_call_operand.hbm [shape: bf16[128,128], index: 7, kind: input, shape index: {}]
  %s8 = inlined_call_operand.vmem [shape: f32[1,128], index: 8, kind: input, shape index: {}]
  %s9 = inlined_call_operand.hbm [shape: f32[2,128], index: 9, kind: output, shape index: {}]
  %s10 = sld [smem:[#allocation0]]
  $region66: #{tpu_custom_call.1} parent=0
    _
  %s12 = ssub.s32 1, %s10
  %s13 = scalar_select 0, %s12, %s10
  $region1: #{tpu_custom_call.1} parent=0
    #allocation3 [shape = 'u8[1024]{0}', space=vmem, size = 0x400, scoped, tag = 'input window, operand 0, single buffered']
    #allocation4 [shape = 's32[1]{0}', space=sflag, size = 0x4, scoped, tag = 'scoped memory for tpu_custom_call.1']
    #allocation5 [shape = 's32[1]{0}', space=sflag, size = 0x4, scoped, tag = 'scoped memory for tpu_custom_call.1']
    #allocation6 [shape = 'u8[65536]{0}', space=vmem, size = 0x10000, scoped, tag = 'input window, operand 1, single buffered']
    #allocation7 [shape = 's32[1]{0}', space=sflag, size = 0x4, scoped, tag = 'scoped memory for tpu_custom_call.1']
    #allocation8 [shape = 'u8[262144]{0}', space=vmem, size = 0x40000, scoped, tag = 'input window, operand 3, single buffered']
    #allocation9 [shape = 'u8[65536]{0}', space=vmem, size = 0x10000, scoped, tag = 'input window, operand 5, single buffered']
    #allocation10 [shape = 's32[1]{0}', space=sflag, size = 0x4, scoped, tag = 'scoped memory for tpu_custom_call.1']
    #allocation11 [shape = 'u8[32768]{0}', space=vmem, size = 0x8000, scoped, tag = 'input window, operand 7, single buffered']
    #allocation12 [shape = 'u8[1024]{0}', space=vmem, size = 0x400, scoped, tag = 'output window, operand 0, single buffered']
    %14 = vsyncpa [#allocation4], 0
    %15 = vsyncpa [#allocation7], 0
    %16 = vsyncpa [#allocation10], 0
    %17 = vsyncpa [#allocation5], 0
    // Predicated region
    $region2: #{tpu_custom_call.1} parent=1 // pred_check
      _
    $region3: #{tpu_custom_call.1} parent=1 // pred_check_branch
      %19 = sbr.rel (0) target = $region5
    $region4: #{tpu_custom_call.1} parent=1 // pred_region
      %s21 = ssub.s32 32, 32
      %22 = vsyncadd [#allocation4], %s21
      %s24 = sshll.u32 [#allocation3], 4
      %s25 = int_to_ptr.vmem [resolvable:$true] %s24
      %27 = dma.hbm_to_vmem [thread:$0]  %s0, 32, %s25, [#allocation4]
    $region5: #{tpu_custom_call.1} parent=1 // pred_fallthru
      _
    // Predicated region
    $region6: #{tpu_custom_call.1} parent=1 // pred_check
      _
    $region7: #{tpu_custom_call.1} parent=1 // pred_check_branch
      %29 = sbr.rel (0) target = $region9
    $region8: #{tpu_custom_call.1} parent=1 // pred_region
      %s31 = ssub.s32 2048, 2048
      %32 = vsyncadd [#allocation7], %s31
      %s33 = sshll.u32 [#allocation6], 4
      %s34 = int_to_ptr.vmem [resolvable:$true] %s33
      %39 = dma.hbm_to_vmem [thread:$0]  %s1, 2048, %s34, [#allocation7], 256, 256, 16
    $region9: #{tpu_custom_call.1} parent=1 // pred_fallthru
      _
    // Predicated region
    $region10: #{tpu_custom_call.1} parent=1 // pred_check
      _
    $region11: #{tpu_custom_call.1} parent=1 // pred_check_branch
      %41 = sbr.rel (0) target = $region13
    $region12: #{tpu_custom_call.1} parent=1 // pred_region
      _
    $region13: #{tpu_custom_call.1} parent=1 // pred_fallthru
      _
    // Predicated region
    $region14: #{tpu_custom_call.1} parent=1 // pred_check
      _
    $region15: #{tpu_custom_call.1} parent=1 // pred_check_branch
      %43 = sbr.rel (0) target = $region17
    $region16: #{tpu_custom_call.1} parent=1 // pred_region
      %s45 = ssub.s32 8192, 8192
      %46 = vsyncadd [#allocation7], %s45
      %s47 = sshll.u32 [#allocation8], 4
      %s48 = int_to_ptr.vmem [resolvable:$true] %s47
      %53 = dma.hbm_to_vmem [thread:$0]  %s3, 8192, %s48, [#allocation7], 128, 128, 8
    $region17: #{tpu_custom_call.1} parent=1 // pred_fallthru
      _
    // Predicated region
    $region18: #{tpu_custom_call.1} parent=1 // pred_check
      _
    $region19: #{tpu_custom_call.1} parent=1 // pred_check_branch
      %55 = sbr.rel (0) target = $region21
    $region20: #{tpu_custom_call.1} parent=1 // pred_region
      _
    $region21: #{tpu_custom_call.1} parent=1 // pred_fallthru
      _
    // Predicated region
    $region22: #{tpu_custom_call.1} parent=1 // pred_check
      _
    $region23: #{tpu_custom_call.1} parent=1 // pred_check_branch
      %57 = sbr.rel (0) target = $region25
    $region24: #{tpu_custom_call.1} parent=1 // pred_region
      %s59 = ssub.s32 2048, 2048
      %60 = vsyncadd [#allocation10], %s59
      %s61 = sshll.u32 [#allocation9], 4
      %s62 = int_to_ptr.vmem [resolvable:$true] %s61
      %67 = dma.hbm_to_vmem [thread:$0]  %s5, 2048, %s62, [#allocation10], 64, 64, 4
    $region25: #{tpu_custom_call.1} parent=1 // pred_fallthru
      _
    // Predicated region
    $region26: #{tpu_custom_call.1} parent=1 // pred_check
      _
    $region27: #{tpu_custom_call.1} parent=1 // pred_check_branch
      %69 = sbr.rel (0) target = $region29
    $region28: #{tpu_custom_call.1} parent=1 // pred_region
      _
    $region29: #{tpu_custom_call.1} parent=1 // pred_fallthru
      _
    // Predicated region
    $region30: #{tpu_custom_call.1} parent=1 // pred_check
      _
    $region31: #{tpu_custom_call.1} parent=1 // pred_check_branch
      %71 = sbr.rel (0) target = $region33
    $region32: #{tpu_custom_call.1} parent=1 // pred_region
      %s73 = ssub.s32 1024, 1024
      %74 = vsyncadd [#allocation10], %s73
      %s75 = sshll.u32 [#allocation11], 4
      %s76 = int_to_ptr.vmem [resolvable:$true] %s75
      %81 = dma.hbm_to_vmem [thread:$0]  %s7, 1024, %s76, [#allocation10], 64, 64, 4
    $region33: #{tpu_custom_call.1} parent=1 // pred_fallthru
      _
    // Predicated region
    $region34: #{tpu_custom_call.1} parent=1 // pred_check
      _
    $region35: #{tpu_custom_call.1} parent=1 // pred_check_branch
      %83 = sbr.rel (0) target = $region37
    $region36: #{tpu_custom_call.1} parent=1 // pred_region
      _
    $region37: #{tpu_custom_call.1} parent=1 // pred_fallthru
      _
    // Predicated region
    $region38: #{tpu_custom_call.1} parent=1 // pred_check
      _
    $region39: #{tpu_custom_call.1} parent=1 // pred_check_branch
      %85 = sbr.rel (0) target = $region41
    $region40: #{tpu_custom_call.1} parent=1 // pred_region
      %86 = dma.done [#allocation4], 32
    $region41: #{tpu_custom_call.1} parent=1 // pred_fallthru
      _
    // Predicated region
    $region42: #{tpu_custom_call.1} parent=1 // pred_check
      _
    $region43: #{tpu_custom_call.1} parent=1 // pred_check_branch
      %88 = sbr.rel (0) target = $region45
    $region44: #{tpu_custom_call.1} parent=1 // pred_region
      %89 = dma.done [#allocation7], 2048
    $region45: #{tpu_custom_call.1} parent=1 // pred_fallthru
      _
    // Predicated region
    $region46: #{tpu_custom_call.1} parent=1 // pred_check
      _
    $region47: #{tpu_custom_call.1} parent=1 // pred_check_branch
      %91 = sbr.rel (0) target = $region49
    $region48: #{tpu_custom_call.1} parent=1 // pred_region
      %92 = dma.done [#allocation7], 8192
    $region49: #{tpu_custom_call.1} parent=1 // pred_fallthru
      _
    // Predicated region
    $region50: #{tpu_custom_call.1} parent=1 // pred_check
      _
    $region51: #{tpu_custom_call.1} parent=1 // pred_check_branch
      %94 = sbr.rel (0) target = $region53
    $region52: #{tpu_custom_call.1} parent=1 // pred_region
      %95 = dma.done [#allocation10], 2048
    $region53: #{tpu_custom_call.1} parent=1 // pred_fallthru
      _
    // Predicated region
    $region54: #{tpu_custom_call.1} parent=1 // pred_check
      _
    $region55: #{tpu_custom_call.1} parent=1 // pred_check_branch
      %97 = sbr.rel (0) target = $region57
    $region56: #{tpu_custom_call.1} parent=1 // pred_region
      %98 = dma.done [#allocation10], 1024
    $region57: #{tpu_custom_call.1} parent=1 // pred_fallthru
      _
    %v100 = vld [vmem:[#allocation3] sm:$0x3]
    %v101 = vadd.f32 %v100, 0.0
    %103 = vrot.lane.b32.xlu0 %v100, 124
    %v104 = vpop.permute.xlu0 %103
    %v106 = vadd.f32 %v101, %v104
    %107 = vrot.lane.b32.xlu0 %v100, 120
    %v108 = vpop.permute.xlu0 %107
    %v110 = vadd.f32 %v106, %v108
    %111 = vrot.lane.b32.xlu0 %v100, 116
    %v112 = vpop.permute.xlu0 %111
    %v114 = vadd.f32 %v110, %v112
    %115 = vrot.lane.b32.xlu0 %v100, 112
    %v116 = vpop.permute.xlu0 %115
    %v118 = vadd.f32 %v114, %v116
    %119 = vrot.lane.b32.xlu0 %v100, 108
    %v120 = vpop.permute.xlu0 %119
    %v122 = vadd.f32 %v118, %v120
    %123 = vrot.lane.b32.xlu0 %v100, 104
    %v124 = vpop.permute.xlu0 %123
    %v126 = vadd.f32 %v122, %v124
    %127 = vrot.lane.b32.xlu0 %v100, 100
    %v128 = vpop.permute.xlu0 %127
    %v130 = vadd.f32 %v126, %v128
    %131 = vrot.lane.b32.xlu0 %v100, 96
    %v132 = vpop.permute.xlu0 %131
    %v134 = vadd.f32 %v130, %v132
    %135 = vrot.lane.b32.xlu0 %v100, 92
    %v136 = vpop.permute.xlu0 %135
    %v138 = vadd.f32 %v134, %v136
    %139 = vrot.lane.b32.xlu0 %v100, 88
    %v140 = vpop.permute.xlu0 %139
    %v142 = vadd.f32 %v138, %v140
    %143 = vrot.lane.b32.xlu0 %v100, 84
    %v144 = vpop.permute.xlu0 %143
    %v146 = vadd.f32 %v142, %v144
    %147 = vrot.lane.b32.xlu0 %v100, 80
    %v148 = vpop.permute.xlu0 %147
    %v150 = vadd.f32 %v146, %v148
    %151 = vrot.lane.b32.xlu0 %v100, 76
    %v152 = vpop.permute.xlu0 %151
    %v154 = vadd.f32 %v150, %v152
    %155 = vrot.lane.b32.xlu0 %v100, 72
    %v156 = vpop.permute.xlu0 %155
    %v158 = vadd.f32 %v154, %v156
    %159 = vrot.lane.b32.xlu0 %v100, 68
    %v160 = vpop.permute.xlu0 %159
    %v162 = vadd.f32 %v158, %v160
    %v163 = vmul.f32 %v162, 0.0625
    %v164 = vsub.f32 %v100, %v163
    %v165 = vmul.f32 %v164, %v164
    %v166 = vadd.f32 %v165, 0.0
    %168 = vrot.lane.b32.xlu0 %v163, 4
    %v169 = vpop.permute.xlu0 %168
    %v171 = vsub.f32 %v100, %v169
    %v172 = vmul.f32 %v171, %v171
    %174 = vrot.lane.b32.xlu0 %v172, 124
    %v175 = vpop.permute.xlu0 %174
    %v177 = vadd.f32 %v166, %v175
    %178 = vrot.lane.b32.xlu0 %v163, 8
    %v179 = vpop.permute.xlu0 %178
    %v181 = vsub.f32 %v100, %v179
    %v182 = vmul.f32 %v181, %v181
    %184 = vrot.lane.b32.xlu0 %v182, 120
    %v185 = vpop.permute.xlu0 %184
    %v187 = vadd.f32 %v177, %v185
    %188 = vrot.lane.b32.xlu0 %v163, 12
    %v189 = vpop.permute.xlu0 %188
    %v191 = vsub.f32 %v100, %v189
    %v192 = vmul.f32 %v191, %v191
    %194 = vrot.lane.b32.xlu0 %v192, 116
    %v195 = vpop.permute.xlu0 %194
    %v197 = vadd.f32 %v187, %v195
    %198 = vrot.lane.b32.xlu0 %v163, 16
    %v199 = vpop.permute.xlu0 %198
    %v201 = vsub.f32 %v100, %v199
    %v202 = vmul.f32 %v201, %v201
    %204 = vrot.lane.b32.xlu0 %v202, 112
    %v205 = vpop.permute.xlu0 %204
    %v207 = vadd.f32 %v197, %v205
    %208 = vrot.lane.b32.xlu0 %v163, 20
    %v209 = vpop.permute.xlu0 %208
    %v211 = vsub.f32 %v100, %v209
    %v212 = vmul.f32 %v211, %v211
    %214 = vrot.lane.b32.xlu0 %v212, 108
    %v215 = vpop.permute.xlu0 %214
    %v217 = vadd.f32 %v207, %v215
    %218 = vrot.lane.b32.xlu0 %v163, 24
    %v219 = vpop.permute.xlu0 %218
    %v221 = vsub.f32 %v100, %v219
    %v222 = vmul.f32 %v221, %v221
    %224 = vrot.lane.b32.xlu0 %v222, 104
    %v225 = vpop.permute.xlu0 %224
    %v227 = vadd.f32 %v217, %v225
    %228 = vrot.lane.b32.xlu0 %v163, 28
    %v229 = vpop.permute.xlu0 %228
    %v231 = vsub.f32 %v100, %v229
    %v232 = vmul.f32 %v231, %v231
    %234 = vrot.lane.b32.xlu0 %v232, 100
    %v235 = vpop.permute.xlu0 %234
    %v237 = vadd.f32 %v227, %v235
    %238 = vrot.lane.b32.xlu0 %v163, 32
    %v239 = vpop.permute.xlu0 %238
    %v241 = vsub.f32 %v100, %v239
    %v242 = vmul.f32 %v241, %v241
    %244 = vrot.lane.b32.xlu0 %v242, 96
    %v245 = vpop.permute.xlu0 %244
    %v247 = vadd.f32 %v237, %v245
    %248 = vrot.lane.b32.xlu0 %v163, 36
    %v249 = vpop.permute.xlu0 %248
    %v251 = vsub.f32 %v100, %v249
    %v252 = vmul.f32 %v251, %v251
    %254 = vrot.lane.b32.xlu0 %v252, 92
    %v255 = vpop.permute.xlu0 %254
    %v257 = vadd.f32 %v247, %v255
    %258 = vrot.lane.b32.xlu0 %v163, 40
    %v259 = vpop.permute.xlu0 %258
    %v261 = vsub.f32 %v100, %v259
    %v262 = vmul.f32 %v261, %v261
    %264 = vrot.lane.b32.xlu0 %v262, 88
    %v265 = vpop.permute.xlu0 %264
    %v267 = vadd.f32 %v257, %v265
    %268 = vrot.lane.b32.xlu0 %v163, 44
    %v269 = vpop.permute.xlu0 %268
    %v271 = vsub.f32 %v100, %v269
    %v272 = vmul.f32 %v271, %v271
    %274 = vrot.lane.b32.xlu0 %v272, 84
    %v275 = vpop.permute.xlu0 %274
    %v277 = vadd.f32 %v267, %v275
    %278 = vrot.lane.b32.xlu0 %v163, 48
    %v279 = vpop.permute.xlu0 %278
    %v281 = vsub.f32 %v100, %v279
    %v282 = vmul.f32 %v281, %v281
    %284 = vrot.lane.b32.xlu0 %v282, 80
    %v285 = vpop.permute.xlu0 %284
    %v287 = vadd.f32 %v277, %v285
    %288 = vrot.lane.b32.xlu0 %v163, 52
    %v289 = vpop.permute.xlu0 %288
    %v291 = vsub.f32 %v100, %v289
    %v292 = vmul.f32 %v291, %v291
    %294 = vrot.lane.b32.xlu0 %v292, 76
    %v295 = vpop.permute.xlu0 %294
    %v297 = vadd.f32 %v287, %v295
    %298 = vrot.lane.b32.xlu0 %v163, 56
    %v299 = vpop.permute.xlu0 %298
    %v301 = vsub.f32 %v100, %v299
    %v302 = vmul.f32 %v301, %v301
    %304 = vrot.lane.b32.xlu0 %v302, 72
    %v305 = vpop.permute.xlu0 %304
    %v307 = vadd.f32 %v297, %v305
    %308 = vrot.lane.b32.xlu0 %v163, 60
    %v309 = vpop.permute.xlu0 %308
    %v311 = vsub.f32 %v100, %v309
    %v312 = vmul.f32 %v311, %v311
    %314 = vrot.lane.b32.xlu0 %v312, 68
    %v315 = vpop.permute.xlu0 %314
    %v317 = vadd.f32 %v307, %v315
    %v318 = vmul.f32 %v317, 0.0625
    %v319 = vadd.f32 %v318, 1e-05
    %v320 = vrsqrt.pop %v319
    %v321 = vmul.f32 %v319, %v320
    %vm322 = vcmp.eq.f32.partialorder %v319, inf
    %v323 = vsel %vm322, %v319, %v321
    %vm324 = vcmp.eq.f32.partialorder %v319, 0.0
    %v325 = vand.u32 %v319, 2147483648
    %v326 = vsel %vm324, %v325, %v323
    %v327 = vrcp.pop %v326
    %v328 = vmul.f32 %v164, %v327
    %vm329 = vcmask 25600
    %330 = vst.msk [vmem:[#allocation2] sm:$0x3] %vm329, %v328
    %v331 = vld [vmem:[#allocation3] sm:$0x3]
    %v332 = vsub.f32 %v331, %v169
    %334 = vrot.lane.b32.xlu0 %v327, 4
    %v335 = vpop.permute.xlu0 %334
    %v337 = vmul.f32 %v332, %v335
    %vm338 = vcmask 58400
    %339 = vst.msk [vmem:[#allocation2] sm:$0x3] %vm338, %v337
    %v340 = vld [vmem:[#allocation3] sm:$0x3]
    %v341 = vsub.f32 %v340, %v179
    %342 = vrot.lane.b32.xlu0 %v327, 8
    %v343 = vpop.permute.xlu0 %342
    %v345 = vmul.f32 %v341, %v343
    %vm346 = vcmask 91200
    %347 = vst.msk [vmem:[#allocation2] sm:$0x3] %vm346, %v345
    %v348 = vld [vmem:[#allocation3] sm:$0x3]
    %v349 = vsub.f32 %v348, %v189
    %350 = vrot.lane.b32.xlu0 %v327, 12
    %v351 = vpop.permute.xlu0 %350
    %v353 = vmul.f32 %v349, %v351
    %vm354 = vcmask 124000
    %355 = vst.msk [vmem:[#allocation2] sm:$0x3] %vm354, %v353
    %v356 = vld [vmem:[#allocation3] sm:$0x3]
    %v357 = vsub.f32 %v356, %v199
    %358 = vrot.lane.b32.xlu0 %v327, 16
    %v359 = vpop.permute.xlu0 %358
    %v361 = vmul.f32 %v357, %v359
    %vm362 = vcmask 156800
    %363 = vst.msk [vmem:[#allocation2] sm:$0x3] %vm362, %v361
    %v364 = vld [vmem:[#allocation3] sm:$0x3]
    %v365 = vsub.f32 %v364, %v209
    %366 = vrot.lane.b32.xlu0 %v327, 20
    %v367 = vpop.permute.xlu0 %366
    %v369 = vmul.f32 %v365, %v367
    %vm370 = vcmask 189600
    %371 = vst.msk [vmem:[#allocation2] sm:$0x3] %vm370, %v369
    %v372 = vld [vmem:[#allocation3] sm:$0x3]
    %v373 = vsub.f32 %v372, %v219
    %374 = vrot.lane.b32.xlu0 %v327, 24
    %v375 = vpop.permute.xlu0 %374
    %v377 = vmul.f32 %v373, %v375
    %vm378 = vcmask 222400
    %379 = vst.msk [vmem:[#allocation2] sm:$0x3] %vm378, %v377
    %v380 = vld [vmem:[#allocation3] sm:$0x3]
    %v381 = vsub.f32 %v380, %v229
    %382 = vrot.lane.b32.xlu0 %v327, 28
    %v383 = vpop.permute.xlu0 %382
    %v385 = vmul.f32 %v381, %v383
    %vm386 = vcmask 255200
    %387 = vst.msk [vmem:[#allocation2] sm:$0x3] %vm386, %v385
    %v388 = vld [vmem:[#allocation3] sm:$0x3]
    %v389 = vsub.f32 %v388, %v239
    %390 = vrot.lane.b32.xlu0 %v327, 32
    %v391 = vpop.permute.xlu0 %390
    %v393 = vmul.f32 %v389, %v391
    %vm394 = vcmask 288000
    %395 = vst.msk [vmem:[#allocation2] sm:$0x3] %vm394, %v393
    %v396 = vld [vmem:[#allocation3] sm:$0x3]
    %v397 = vsub.f32 %v396, %v249
    %398 = vrot.lane.b32.xlu0 %v327, 36
    %v399 = vpop.permute.xlu0 %398
    %v401 = vmul.f32 %v397, %v399
    %vm402 = vcmask 320800
    %403 = vst.msk [vmem:[#allocation2] sm:$0x3] %vm402, %v401
    %v404 = vld [vmem:[#allocation3] sm:$0x3]
    %v405 = vsub.f32 %v404, %v259
    %406 = vrot.lane.b32.xlu0 %v327, 40
    %v407 = vpop.permute.xlu0 %406
    %v409 = vmul.f32 %v405, %v407
    %vm410 = vcmask 353600
    %411 = vst.msk [vmem:[#allocation2] sm:$0x3] %vm410, %v409
    %v412 = vld [vmem:[#allocation3] sm:$0x3]
    %v413 = vsub.f32 %v412, %v269
    %414 = vrot.lane.b32.xlu0 %v327, 44
    %v415 = vpop.permute.xlu0 %414
    %v417 = vmul.f32 %v413, %v415
    %vm418 = vcmask 386400
    %419 = vst.msk [vmem:[#allocation2] sm:$0x3] %vm418, %v417
    %v420 = vld [vmem:[#allocation3] sm:$0x3]
    %v421 = vsub.f32 %v420, %v279
    %422 = vrot.lane.b32.xlu0 %v327, 48
    %v423 = vpop.permute.xlu0 %422
    %v425 = vmul.f32 %v421, %v423
    %vm426 = vcmask 419200
    %427 = vst.msk [vmem:[#allocation2] sm:$0x3] %vm426, %v425
    %v428 = vld [vmem:[#allocation3] sm:$0x3]
    %v429 = vsub.f32 %v428, %v289
    %430 = vrot.lane.b32.xlu0 %v327, 52
    %v431 = vpop.permute.xlu0 %430
    %v433 = vmul.f32 %v429, %v431
    %vm434 = vcmask 452000
    %435 = vst.msk [vmem:[#allocation2] sm:$0x3] %vm434, %v433
    %v436 = vld [vmem:[#allocation3] sm:$0x3]
    %v437 = vsub.f32 %v436, %v299
    %438 = vrot.lane.b32.xlu0 %v327, 56
    %v439 = vpop.permute.xlu0 %438
    %v441 = vmul.f32 %v437, %v439
    %vm442 = vcmask 484800
    %443 = vst.msk [vmem:[#allocation2] sm:$0x3] %vm442, %v441
    %v444 = vld [vmem:[#allocation3] sm:$0x3]
    %v445 = vsub.f32 %v444, %v309
    %446 = vrot.lane.b32.xlu0 %v327, 60
    %v447 = vpop.permute.xlu0 %446
    %v449 = vmul.f32 %v445, %v447
    %vm450 = vcmask 517600
    %451 = vst.msk [vmem:[#allocation2] sm:$0x3] %vm450, %v449
    %v452 = vld [vmem:[#allocation2] sm:$0x3]
    %v453 = vpack.c.bf16 %v452, %v452
    %v454 = vld [vmem:[#allocation6] sm:$0xff]
    %v455 = vld [vmem:[#allocation6 + $0x8] sm:$0xff]
    %v456 = vld [vmem:[#allocation6 + $0x10] sm:$0xff]
    %v457 = vld [vmem:[#allocation6 + $0x18] sm:$0xff]
    %v458 = vld [vmem:[#allocation6 + $0x20] sm:$0xff]
    %v459 = vld [vmem:[#allocation6 + $0x28] sm:$0xff]
    %v460 = vld [vmem:[#allocation6 + $0x30] sm:$0xff]
    %v461 = vld [vmem:[#allocation6 + $0x38] sm:$0xff]
    %v462 = vld [vmem:[#allocation6 + $0x40] sm:$0xff]
    %v463 = vld [vmem:[#allocation6 + $0x48] sm:$0xff]
    %v464 = vld [vmem:[#allocation6 + $0x50] sm:$0xff]
    %v465 = vld [vmem:[#allocation6 + $0x58] sm:$0xff]
    %v466 = vld [vmem:[#allocation6 + $0x60] sm:$0xff]
    %v467 = vld [vmem:[#allocation6 + $0x68] sm:$0xff]
    %v468 = vld [vmem:[#allocation6 + $0x70] sm:$0xff]
    %v469 = vld [vmem:[#allocation6 + $0x78] sm:$0xff]
    %v470 = vld [vmem:[%s2] sm:$0xf]
    %v472 = vlaneseq
    %v473 = vshrl.u32 %v472, 7
    %v474 = vsub.s32 0, %v473
    %v475 = vrot.slane %v470, %v474
    %v476 = vlaneseq
    %v477 = vshrl.u32 %v476, 7
    %v478 = vsub.s32 1, %v477
    %v479 = vrot.slane %v470, %v478
    %v480 = vlaneseq
    %v481 = vshrl.u32 %v480, 7
    %v482 = vsub.s32 2, %v481
    %v483 = vrot.slane %v470, %v482
    %v484 = vlaneseq
    %v485 = vshrl.u32 %v484, 7
    %v486 = vsub.s32 3, %v485
    %v487 = vrot.slane %v470, %v486
    %v508 = vunpack.c.l.b16 %v454
    %v509 = vunpack.c.h.b16 %v454
    %v510 = vunpack.c.l.b16 %v455
    %v511 = vunpack.c.h.b16 %v455
    %v512 = vunpack.c.l.b16 %v456
    %v513 = vunpack.c.h.b16 %v456
    %v514 = vunpack.c.l.b16 %v457
    %v515 = vunpack.c.h.b16 %v457
    %v516 = vunpack.c.l.b16 %v458
    %v517 = vunpack.c.h.b16 %v458
    %v518 = vunpack.c.l.b16 %v459
    %v519 = vunpack.c.h.b16 %v459
    %v520 = vunpack.c.l.b16 %v460
    %v521 = vunpack.c.h.b16 %v460
    %v522 = vunpack.c.l.b16 %v461
    %v523 = vunpack.c.h.b16 %v461
    %v524 = vunpack.c.l.b16 %v462
    %v525 = vunpack.c.h.b16 %v462
    %v526 = vunpack.c.l.b16 %v463
    %v527 = vunpack.c.h.b16 %v463
    %v528 = vunpack.c.l.b16 %v464
    %v529 = vunpack.c.h.b16 %v464
    %v530 = vunpack.c.l.b16 %v465
    %v531 = vunpack.c.h.b16 %v465
    %v532 = vunpack.c.l.b16 %v466
    %v533 = vunpack.c.h.b16 %v466
    %v534 = vunpack.c.l.b16 %v467
    %v535 = vunpack.c.h.b16 %v467
    %v536 = vunpack.c.l.b16 %v468
    %v537 = vunpack.c.h.b16 %v468
    %v538 = vunpack.c.l.b16 %v469
    %v539 = vunpack.c.h.b16 %v469
    %v540 = vpack.c.b16 %v512, %v508
    %v541 = vpack.c.b16 %v513, %v509
    %v542 = vpack.c.b16 %v514, %v510
    %v543 = vpack.c.b16 %v515, %v511
    %v544 = vpack.c.b16 %v520, %v516
    %v545 = vpack.c.b16 %v521, %v517
    %v546 = vpack.c.b16 %v522, %v518
    %v547 = vpack.c.b16 %v523, %v519
    %v548 = vpack.c.b16 %v528, %v524
    %v549 = vpack.c.b16 %v529, %v525
    %v550 = vpack.c.b16 %v530, %v526
    %v551 = vpack.c.b16 %v531, %v527
    %v552 = vpack.c.b16 %v536, %v532
    %v553 = vpack.c.b16 %v537, %v533
    %v554 = vpack.c.b16 %v538, %v534
    %v555 = vpack.c.b16 %v539, %v535
    %vm572 = vcmask 523264
    %v574 = vsel %vm572, %v453, 0
    %576 = vmatprep.subr.bf16.mxu0 %v541
    %577 = vmatpush1.bf16.msra.mxu0 %v540
    %578 = vmatprep.subr.bf16.mxu0 %v545
    %579 = vmatpush1.bf16.msra.mxu0 %v544
    %580 = vmatprep.subr.bf16.mxu0 %v549
    %581 = vmatpush1.bf16.msra.mxu0 %v548
    %582 = vmatprep.subr.bf16.mxu0 %v553
    %583 = vmatpush1.bf16.msra.mxu0 %v552
    %584 = vmatprep.subr.bf16.mxu0 0
    %585 = vmatpush1.bf16.msra.mxu0 0
    %586 = vmatprep.subr.bf16.mxu0 0
    %587 = vmatpush1.bf16.msra.mxu0 0
    %588 = vmatprep.subr.bf16.mxu0 0
    %589 = vmatpush1.bf16.msra.mxu0 0
    %590 = vmatprep.subr.bf16.mxu0 0
    %591 = vmatpush1.bf16.msra.mxu0 0
    %592 = vmatprep.subr.bf16.mxu0 0
    %593 = vmatpush1.bf16.msra.mxu0 0
    %594 = vmatprep.subr.bf16.mxu0 0
    %595 = vmatpush1.bf16.msra.mxu0 0
    %596 = vmatprep.subr.bf16.mxu0 0
    %597 = vmatpush1.bf16.msra.mxu0 0
    %598 = vmatprep.subr.bf16.mxu0 0
    %599 = vmatpush1.bf16.msra.mxu0 0
    %600 = vmatprep.subr.bf16.mxu0 0
    %601 = vmatpush1.bf16.msra.mxu0 0
    %602 = vmatprep.subr.bf16.mxu0 0
    %603 = vmatpush1.bf16.msra.mxu0 0
    %604 = vmatprep.subr.bf16.mxu0 0
    %605 = vmatpush1.bf16.msra.mxu0 0
    %606 = vmatprep.subr.bf16.mxu0 0
    %607 = vmatpush1.bf16.msra.mxu0 0
    %608 = vmatprep.mubr.bf16.mxu0 0
    %609 = vmatmul.mubr.bf16.gmra.mrb[0].mxu0 %v574
    %v610 = vpop.f32.mrb[0].mxu0
    %v611 = vadd.f32 %v475, %v610
    %v612 = vpop.f32.mrb[0].mxu0
    %v613 = vadd.f32 %v479, %v612
    %v614 = vpop.f32.mrb[0].mxu0
    %v615 = vpop.f32.mrb[0].mxu0
    %616 = vdwg.mxu0
    %617 = vmatprep.subr.bf16.mxu0 %v543
    %618 = vmatpush1.bf16.msra.mxu0 %v542
    %619 = vmatprep.subr.bf16.mxu0 %v547
    %620 = vmatpush1.bf16.msra.mxu0 %v546
    %621 = vmatprep.subr.bf16.mxu0 %v551
    %622 = vmatpush1.bf16.msra.mxu0 %v550
    %623 = vmatprep.subr.bf16.mxu0 %v555
    %624 = vmatpush1.bf16.msra.mxu0 %v554
    %625 = vmatprep.subr.bf16.mxu0 0
    %626 = vmatpush1.bf16.msra.mxu0 0
    %627 = vmatprep.subr.bf16.mxu0 0
    %628 = vmatpush1.bf16.msra.mxu0 0
    %629 = vmatprep.subr.bf16.mxu0 0
    %630 = vmatpush1.bf16.msra.mxu0 0
    %631 = vmatprep.subr.bf16.mxu0 0
    %632 = vmatpush1.bf16.msra.mxu0 0
    %633 = vmatprep.subr.bf16.mxu0 0
    %634 = vmatpush1.bf16.msra.mxu0 0
    %635 = vmatprep.subr.bf16.mxu0 0
    %636 = vmatpush1.bf16.msra.mxu0 0
    %637 = vmatprep.subr.bf16.mxu0 0
    %638 = vmatpush1.bf16.msra.mxu0 0
    %639 = vmatprep.subr.bf16.mxu0 0
    %640 = vmatpush1.bf16.msra.mxu0 0
    %641 = vmatprep.subr.bf16.mxu0 0
    %642 = vmatpush1.bf16.msra.mxu0 0
    %643 = vmatprep.subr.bf16.mxu0 0
    %644 = vmatpush1.bf16.msra.mxu0 0
    %645 = vmatprep.subr.bf16.mxu0 0
    %646 = vmatpush1.bf16.msra.mxu0 0
    %647 = vmatprep.subr.bf16.mxu0 0
    %648 = vmatpush1.bf16.msra.mxu0 0
    %649 = vmatprep.mubr.bf16.mxu0 0
    %650 = vmatmul.mubr.bf16.gmra.mrb[0].mxu0 %v574
    %v651 = vpop.f32.mrb[0].mxu0
    %v652 = vadd.f32 %v483, %v651
    %v653 = vpop.f32.mrb[0].mxu0
    %v654 = vadd.f32 %v487, %v653
    %v655 = vpop.f32.mrb[0].mxu0
    %v656 = vpop.f32.mrb[0].mxu0
    %657 = vdwg.mxu0
    %v658 = vmax.f32 %v611, 0.0
    %v659 = vmax.f32 %v613, 0.0
    %v660 = vmax.f32 %v652, 0.0
    %v661 = vmax.f32 %v654, 0.0
    %v662 = vpack.c.bf16 %v658, %v658
    %v663 = vpack.c.bf16 %v659, %v659
    %v664 = vpack.c.bf16 %v660, %v660
    %v665 = vpack.c.bf16 %v661, %v661
    %v666 = vld [vmem:[#allocation8] sm:$0xff]
    %v667 = vld [vmem:[#allocation8 + $0x8] sm:$0xff]
    %v668 = vld [vmem:[#allocation8 + $0x10] sm:$0xff]
    %v669 = vld [vmem:[#allocation8 + $0x18] sm:$0xff]
    %v670 = vld [vmem:[#allocation8 + $0x20] sm:$0xff]
    %v671 = vld [vmem:[#allocation8 + $0x28] sm:$0xff]
    %v672 = vld [vmem:[#allocation8 + $0x30] sm:$0xff]
    %v673 = vld [vmem:[#allocation8 + $0x38] sm:$0xff]
    %v674 = vld [vmem:[#allocation8 + $0x40] sm:$0xff]
    %v675 = vld [vmem:[#allocation8 + $0x48] sm:$0xff]
    %v676 = vld [vmem:[#allocation8 + $0x50] sm:$0xff]
    %v677 = vld [vmem:[#allocation8 + $0x58] sm:$0xff]
    %v678 = vld [vmem:[#allocation8 + $0x60] sm:$0xff]
    %v679 = vld [vmem:[#allocation8 + $0x68] sm:$0xff]
    %v680 = vld [vmem:[#allocation8 + $0x70] sm:$0xff]
    %v681 = vld [vmem:[#allocation8 + $0x78] sm:$0xff]
    %v682 = vld [vmem:[#allocation8 + $0x80] sm:$0xff]
    %v683 = vld [vmem:[#allocation8 + $0x88] sm:$0xff]
    %v684 = vld [vmem:[#allocation8 + $0x90] sm:$0xff]
    %v685 = vld [vmem:[#allocation8 + $0x98] sm:$0xff]
    %v686 = vld [vmem:[#allocation8 + $0xa0] sm:$0xff]
    %v687 = vld [vmem:[#allocation8 + $0xa8] sm:$0xff]
    %v688 = vld [vmem:[#allocation8 + $0xb0] sm:$0xff]
    %v689 = vld [vmem:[#allocation8 + $0xb8] sm:$0xff]
    %v690 = vld [vmem:[#allocation8 + $0xc0] sm:$0xff]
    %v691 = vld [vmem:[#allocation8 + $0xc8] sm:$0xff]
    %v692 = vld [vmem:[#allocation8 + $0xd0] sm:$0xff]
    %v693 = vld [vmem:[#allocation8 + $0xd8] sm:$0xff]
    %v694 = vld [vmem:[#allocation8 + $0xe0] sm:$0xff]
    %v695 = vld [vmem:[#allocation8 + $0xe8] sm:$0xff]
    %v696 = vld [vmem:[#allocation8 + $0xf0] sm:$0xff]
    %v697 = vld [vmem:[#allocation8 + $0xf8] sm:$0xff]
    %v698 = vld [vmem:[#allocation8 + $0x100] sm:$0xff]
    %v699 = vld [vmem:[#allocation8 + $0x108] sm:$0xff]
    %v700 = vld [vmem:[#allocation8 + $0x110] sm:$0xff]
    %v701 = vld [vmem:[#allocation8 + $0x118] sm:$0xff]
    %v702 = vld [vmem:[#allocation8 + $0x120] sm:$0xff]
    %v703 = vld [vmem:[#allocation8 + $0x128] sm:$0xff]
    %v704 = vld [vmem:[#allocation8 + $0x130] sm:$0xff]
    %v705 = vld [vmem:[#allocation8 + $0x138] sm:$0xff]
    %v706 = vld [vmem:[#allocation8 + $0x140] sm:$0xff]
    %v707 = vld [vmem:[#allocation8 + $0x148] sm:$0xff]
    %v708 = vld [vmem:[#allocation8 + $0x150] sm:$0xff]
    %v709 = vld [vmem:[#allocation8 + $0x158] sm:$0xff]
    %v710 = vld [vmem:[#allocation8 + $0x160] sm:$0xff]
    %v711 = vld [vmem:[#allocation8 + $0x168] sm:$0xff]
    %v712 = vld [vmem:[#allocation8 + $0x170] sm:$0xff]
    %v713 = vld [vmem:[#allocation8 + $0x178] sm:$0xff]
    %v714 = vld [vmem:[#allocation8 + $0x180] sm:$0xff]
    %v715 = vld [vmem:[#allocation8 + $0x188] sm:$0xff]
    %v716 = vld [vmem:[#allocation8 + $0x190] sm:$0xff]
    %v717 = vld [vmem:[#allocation8 + $0x198] sm:$0xff]
    %v718 = vld [vmem:[#allocation8 + $0x1a0] sm:$0xff]
    %v719 = vld [vmem:[#allocation8 + $0x1a8] sm:$0xff]
    %v720 = vld [vmem:[#allocation8 + $0x1b0] sm:$0xff]
    %v721 = vld [vmem:[#allocation8 + $0x1b8] sm:$0xff]
    %v722 = vld [vmem:[#allocation8 + $0x1c0] sm:$0xff]
    %v723 = vld [vmem:[#allocation8 + $0x1c8] sm:$0xff]
    %v724 = vld [vmem:[#allocation8 + $0x1d0] sm:$0xff]
    %v725 = vld [vmem:[#allocation8 + $0x1d8] sm:$0xff]
    %v726 = vld [vmem:[#allocation8 + $0x1e0] sm:$0xff]
    %v727 = vld [vmem:[#allocation8 + $0x1e8] sm:$0xff]
    %v728 = vld [vmem:[#allocation8 + $0x1f0] sm:$0xff]
    %v729 = vld [vmem:[#allocation8 + $0x1f8] sm:$0xff]
    %v730 = vld [vmem:[%s4] sm:$0x3]
    %v732 = vlaneseq
    %v733 = vshrl.u32 %v732, 7
    %v734 = vsub.s32 0, %v733
    %v735 = vrot.slane %v730, %v734
    %v736 = vlaneseq
    %v737 = vshrl.u32 %v736, 7
    %v738 = vsub.s32 1, %v737
    %v739 = vrot.slane %v730, %v738
    %v806 = vunpack.c.l.b16 %v666
    %v807 = vunpack.c.h.b16 %v666
    %v808 = vunpack.c.l.b16 %v667
    %v809 = vunpack.c.h.b16 %v667
    %v810 = vunpack.c.l.b16 %v668
    %v811 = vunpack.c.h.b16 %v668
    %v812 = vunpack.c.l.b16 %v669
    %v813 = vunpack.c.h.b16 %v669
    %v814 = vunpack.c.l.b16 %v670
    %v815 = vunpack.c.h.b16 %v670
    %v816 = vunpack.c.l.b16 %v671
    %v817 = vunpack.c.h.b16 %v671
    %v818 = vunpack.c.l.b16 %v672
    %v819 = vunpack.c.h.b16 %v672
    %v820 = vunpack.c.l.b16 %v673
    %v821 = vunpack.c.h.b16 %v673
    %v822 = vunpack.c.l.b16 %v674
    %v823 = vunpack.c.h.b16 %v674
    %v824 = vunpack.c.l.b16 %v675
    %v825 = vunpack.c.h.b16 %v675
    %v826 = vunpack.c.l.b16 %v676
    %v827 = vunpack.c.h.b16 %v676
    %v828 = vunpack.c.l.b16 %v677
    %v829 = vunpack.c.h.b16 %v677
    %v830 = vunpack.c.l.b16 %v678
    %v831 = vunpack.c.h.b16 %v678
    %v832 = vunpack.c.l.b16 %v679
    %v833 = vunpack.c.h.b16 %v679
    %v834 = vunpack.c.l.b16 %v680
    %v835 = vunpack.c.h.b16 %v680
    %v836 = vunpack.c.l.b16 %v681
    %v837 = vunpack.c.h.b16 %v681
    %v838 = vunpack.c.l.b16 %v682
    %v839 = vunpack.c.h.b16 %v682
    %v840 = vunpack.c.l.b16 %v683
    %v841 = vunpack.c.h.b16 %v683
    %v842 = vunpack.c.l.b16 %v684
    %v843 = vunpack.c.h.b16 %v684
    %v844 = vunpack.c.l.b16 %v685
    %v845 = vunpack.c.h.b16 %v685
    %v846 = vunpack.c.l.b16 %v686
    %v847 = vunpack.c.h.b16 %v686
    %v848 = vunpack.c.l.b16 %v687
    %v849 = vunpack.c.h.b16 %v687
    %v850 = vunpack.c.l.b16 %v688
    %v851 = vunpack.c.h.b16 %v688
    %v852 = vunpack.c.l.b16 %v689
    %v853 = vunpack.c.h.b16 %v689
    %v854 = vunpack.c.l.b16 %v690
    %v855 = vunpack.c.h.b16 %v690
    %v856 = vunpack.c.l.b16 %v691
    %v857 = vunpack.c.h.b16 %v691
    %v858 = vunpack.c.l.b16 %v692
    %v859 = vunpack.c.h.b16 %v692
    %v860 = vunpack.c.l.b16 %v693
    %v861 = vunpack.c.h.b16 %v693
    %v862 = vunpack.c.l.b16 %v694
    %v863 = vunpack.c.h.b16 %v694
    %v864 = vunpack.c.l.b16 %v695
    %v865 = vunpack.c.h.b16 %v695
    %v866 = vunpack.c.l.b16 %v696
    %v867 = vunpack.c.h.b16 %v696
    %v868 = vunpack.c.l.b16 %v697
    %v869 = vunpack.c.h.b16 %v697
    %v870 = vunpack.c.l.b16 %v698
    %v871 = vunpack.c.h.b16 %v698
    %v872 = vunpack.c.l.b16 %v699
    %v873 = vunpack.c.h.b16 %v699
    %v874 = vunpack.c.l.b16 %v700
    %v875 = vunpack.c.h.b16 %v700
    %v876 = vunpack.c.l.b16 %v701
    %v877 = vunpack.c.h.b16 %v701
    %v878 = vunpack.c.l.b16 %v702
    %v879 = vunpack.c.h.b16 %v702
    %v880 = vunpack.c.l.b16 %v703
    %v881 = vunpack.c.h.b16 %v703
    %v882 = vunpack.c.l.b16 %v704
    %v883 = vunpack.c.h.b16 %v704
    %v884 = vunpack.c.l.b16 %v705
    %v885 = vunpack.c.h.b16 %v705
    %v886 = vunpack.c.l.b16 %v706
    %v887 = vunpack.c.h.b16 %v706
    %v888 = vunpack.c.l.b16 %v707
    %v889 = vunpack.c.h.b16 %v707
    %v890 = vunpack.c.l.b16 %v708
    %v891 = vunpack.c.h.b16 %v708
    %v892 = vunpack.c.l.b16 %v709
    %v893 = vunpack.c.h.b16 %v709
    %v894 = vunpack.c.l.b16 %v710
    %v895 = vunpack.c.h.b16 %v710
    %v896 = vunpack.c.l.b16 %v711
    %v897 = vunpack.c.h.b16 %v711
    %v898 = vunpack.c.l.b16 %v712
    %v899 = vunpack.c.h.b16 %v712
    %v900 = vunpack.c.l.b16 %v713
    %v901 = vunpack.c.h.b16 %v713
    %v902 = vunpack.c.l.b16 %v714
    %v903 = vunpack.c.h.b16 %v714
    %v904 = vunpack.c.l.b16 %v715
    %v905 = vunpack.c.h.b16 %v715
    %v906 = vunpack.c.l.b16 %v716
    %v907 = vunpack.c.h.b16 %v716
    %v908 = vunpack.c.l.b16 %v717
    %v909 = vunpack.c.h.b16 %v717
    %v910 = vunpack.c.l.b16 %v718
    %v911 = vunpack.c.h.b16 %v718
    %v912 = vunpack.c.l.b16 %v719
    %v913 = vunpack.c.h.b16 %v719
    %v914 = vunpack.c.l.b16 %v720
    %v915 = vunpack.c.h.b16 %v720
    %v916 = vunpack.c.l.b16 %v721
    %v917 = vunpack.c.h.b16 %v721
    %v918 = vunpack.c.l.b16 %v722
    %v919 = vunpack.c.h.b16 %v722
    %v920 = vunpack.c.l.b16 %v723
    %v921 = vunpack.c.h.b16 %v723
    %v922 = vunpack.c.l.b16 %v724
    %v923 = vunpack.c.h.b16 %v724
    %v924 = vunpack.c.l.b16 %v725
    %v925 = vunpack.c.h.b16 %v725
    %v926 = vunpack.c.l.b16 %v726
    %v927 = vunpack.c.h.b16 %v726
    %v928 = vunpack.c.l.b16 %v727
    %v929 = vunpack.c.h.b16 %v727
    %v930 = vunpack.c.l.b16 %v728
    %v931 = vunpack.c.h.b16 %v728
    %v932 = vunpack.c.l.b16 %v729
    %v933 = vunpack.c.h.b16 %v729
    %v934 = vpack.c.b16 %v808, %v806
    %v935 = vpack.c.b16 %v809, %v807
    %v936 = vpack.c.b16 %v812, %v810
    %v937 = vpack.c.b16 %v813, %v811
    %v938 = vpack.c.b16 %v816, %v814
    %v939 = vpack.c.b16 %v817, %v815
    %v940 = vpack.c.b16 %v820, %v818
    %v941 = vpack.c.b16 %v821, %v819
    %v942 = vpack.c.b16 %v824, %v822
    %v943 = vpack.c.b16 %v825, %v823
    %v944 = vpack.c.b16 %v828, %v826
    %v945 = vpack.c.b16 %v829, %v827
    %v946 = vpack.c.b16 %v832, %v830
    %v947 = vpack.c.b16 %v833, %v831
    %v948 = vpack.c.b16 %v836, %v834
    %v949 = vpack.c.b16 %v837, %v835
    %v950 = vpack.c.b16 %v840, %v838
    %v951 = vpack.c.b16 %v841, %v839
    %v952 = vpack.c.b16 %v844, %v842
    %v953 = vpack.c.b16 %v845, %v843
    %v954 = vpack.c.b16 %v848, %v846
    %v955 = vpack.c.b16 %v849, %v847
    %v956 = vpack.c.b16 %v852, %v850
    %v957 = vpack.c.b16 %v853, %v851
    %v958 = vpack.c.b16 %v856, %v854
    %v959 = vpack.c.b16 %v857, %v855
    %v960 = vpack.c.b16 %v860, %v858
    %v961 = vpack.c.b16 %v861, %v859
    %v962 = vpack.c.b16 %v864, %v862
    %v963 = vpack.c.b16 %v865, %v863
    %v964 = vpack.c.b16 %v868, %v866
    %v965 = vpack.c.b16 %v869, %v867
    %v966 = vpack.c.b16 %v872, %v870
    %v967 = vpack.c.b16 %v873, %v871
    %v968 = vpack.c.b16 %v876, %v874
    %v969 = vpack.c.b16 %v877, %v875
    %v970 = vpack.c.b16 %v880, %v878
    %v971 = vpack.c.b16 %v881, %v879
    %v972 = vpack.c.b16 %v884, %v882
    %v973 = vpack.c.b16 %v885, %v883
    %v974 = vpack.c.b16 %v888, %v886
    %v975 = vpack.c.b16 %v889, %v887
    %v976 = vpack.c.b16 %v892, %v890
    %v977 = vpack.c.b16 %v893, %v891
    %v978 = vpack.c.b16 %v896, %v894
    %v979 = vpack.c.b16 %v897, %v895
    %v980 = vpack.c.b16 %v900, %v898
    %v981 = vpack.c.b16 %v901, %v899
    %v982 = vpack.c.b16 %v904, %v902
    %v983 = vpack.c.b16 %v905, %v903
    %v984 = vpack.c.b16 %v908, %v906
    %v985 = vpack.c.b16 %v909, %v907
    %v986 = vpack.c.b16 %v912, %v910
    %v987 = vpack.c.b16 %v913, %v911
    %v988 = vpack.c.b16 %v916, %v914
    %v989 = vpack.c.b16 %v917, %v915
    %v990 = vpack.c.b16 %v920, %v918
    %v991 = vpack.c.b16 %v921, %v919
    %v992 = vpack.c.b16 %v924, %v922
    %v993 = vpack.c.b16 %v925, %v923
    %v994 = vpack.c.b16 %v928, %v926
    %v995 = vpack.c.b16 %v929, %v927
    %v996 = vpack.c.b16 %v932, %v930
    %v997 = vpack.c.b16 %v933, %v931
    %1062 = vmatprep.subr.bf16.mxu0 %v935
    %1063 = vmatpush1.bf16.msra.mxu0 %v934
    %1064 = vmatprep.subr.bf16.mxu0 %v937
    %1065 = vmatpush1.bf16.msra.mxu0 %v936
    %1066 = vmatprep.subr.bf16.mxu0 %v939
    %1067 = vmatpush1.bf16.msra.mxu0 %v938
    %1068 = vmatprep.subr.bf16.mxu0 %v941
    %1069 = vmatpush1.bf16.msra.mxu0 %v940
    %1070 = vmatprep.subr.bf16.mxu0 %v943
    %1071 = vmatpush1.bf16.msra.mxu0 %v942
    %1072 = vmatprep.subr.bf16.mxu0 %v945
    %1073 = vmatpush1.bf16.msra.mxu0 %v944
    %1074 = vmatprep.subr.bf16.mxu0 %v947
    %1075 = vmatpush1.bf16.msra.mxu0 %v946
    %1076 = vmatprep.subr.bf16.mxu0 %v949
    %1077 = vmatpush1.bf16.msra.mxu0 %v948
    %1078 = vmatprep.subr.bf16.mxu0 %v951
    %1079 = vmatpush1.bf16.msra.mxu0 %v950
    %1080 = vmatprep.subr.bf16.mxu0 %v953
    %1081 = vmatpush1.bf16.msra.mxu0 %v952
    %1082 = vmatprep.subr.bf16.mxu0 %v955
    %1083 = vmatpush1.bf16.msra.mxu0 %v954
    %1084 = vmatprep.subr.bf16.mxu0 %v957
    %1085 = vmatpush1.bf16.msra.mxu0 %v956
    %1086 = vmatprep.subr.bf16.mxu0 %v959
    %1087 = vmatpush1.bf16.msra.mxu0 %v958
    %1088 = vmatprep.subr.bf16.mxu0 %v961
    %1089 = vmatpush1.bf16.msra.mxu0 %v960
    %1090 = vmatprep.subr.bf16.mxu0 %v963
    %1091 = vmatpush1.bf16.msra.mxu0 %v962
    %1092 = vmatprep.subr.bf16.mxu0 %v965
    %1093 = vmatpush1.bf16.msra.mxu0 %v964
    %1094 = vmatprep.mubr.bf16.mxu0 %v663
    %1095 = vmatmul.mubr.bf16.gmra.mrb[0].mxu0 %v662
    %v1096 = vpop.f32.mrb[0].mxu0
    %v1097 = vadd.f32 %v735, %v1096
    %v1098 = vpop.f32.mrb[0].mxu0
    %v1099 = vadd.f32 %v739, %v1098
    %v1100 = vpop.f32.mrb[0].mxu0
    %v1101 = vpop.f32.mrb[0].mxu0
    %1102 = vdwg.mxu0
    %1103 = vmatprep.subr.bf16.mxu0 %v967
    %1104 = vmatpush1.bf16.msra.mxu0 %v966
    %1105 = vmatprep.subr.bf16.mxu0 %v969
    %1106 = vmatpush1.bf16.msra.mxu0 %v968
    %1107 = vmatprep.subr.bf16.mxu0 %v971
    %1108 = vmatpush1.bf16.msra.mxu0 %v970
    %1109 = vmatprep.subr.bf16.mxu0 %v973
    %1110 = vmatpush1.bf16.msra.mxu0 %v972
    %1111 = vmatprep.subr.bf16.mxu0 %v975
    %1112 = vmatpush1.bf16.msra.mxu0 %v974
    %1113 = vmatprep.subr.bf16.mxu0 %v977
    %1114 = vmatpush1.bf16.msra.mxu0 %v976
    %1115 = vmatprep.subr.bf16.mxu0 %v979
    %1116 = vmatpush1.bf16.msra.mxu0 %v978
    %1117 = vmatprep.subr.bf16.mxu0 %v981
    %1118 = vmatpush1.bf16.msra.mxu0 %v980
    %1119 = vmatprep.subr.bf16.mxu0 %v983
    %1120 = vmatpush1.bf16.msra.mxu0 %v982
    %1121 = vmatprep.subr.bf16.mxu0 %v985
    %1122 = vmatpush1.bf16.msra.mxu0 %v984
    %1123 = vmatprep.subr.bf16.mxu0 %v987
    %1124 = vmatpush1.bf16.msra.mxu0 %v986
    %1125 = vmatprep.subr.bf16.mxu0 %v989
    %1126 = vmatpush1.bf16.msra.mxu0 %v988
    %1127 = vmatprep.subr.bf16.mxu0 %v991
    %1128 = vmatpush1.bf16.msra.mxu0 %v990
    %1129 = vmatprep.subr.bf16.mxu0 %v993
    %1130 = vmatpush1.bf16.msra.mxu0 %v992
    %1131 = vmatprep.subr.bf16.mxu0 %v995
    %1132 = vmatpush1.bf16.msra.mxu0 %v994
    %1133 = vmatprep.subr.bf16.mxu0 %v997
    %1134 = vmatpush1.bf16.msra.mxu0 %v996
    %1135 = vmatprep.mubr.bf16.mxu0 %v665
    %1136 = vmatmul.mubr.bf16.gmra.mrb[0].mxu0 %v664
    %v1137 = vpop.f32.mrb[0].mxu0
    %v1138 = vadd.f32 %v1097, %v1137
    %v1139 = vpop.f32.mrb[0].mxu0
    %v1140 = vadd.f32 %v1099, %v1139
    %v1141 = vpop.f32.mrb[0].mxu0
    %v1142 = vpop.f32.mrb[0].mxu0
    %1143 = vdwg.mxu0
    %v1144 = vmax.f32 %v1138, 0.0
    %v1145 = vmax.f32 %v1140, 0.0
    %v1146 = vpack.c.bf16 %v1144, %v1144
    %v1147 = vpack.c.bf16 %v1145, %v1145
    %v1148 = vld [vmem:[#allocation9] sm:$0xf]
    %v1149 = vld [vmem:[#allocation9 + $0x4] sm:$0xf]
    %v1150 = vld [vmem:[#allocation9 + $0x8] sm:$0xf]
    %v1151 = vld [vmem:[#allocation9 + $0xc] sm:$0xf]
    %v1152 = vld [vmem:[#allocation9 + $0x10] sm:$0xf]
    %v1153 = vld [vmem:[#allocation9 + $0x14] sm:$0xf]
    %v1154 = vld [vmem:[#allocation9 + $0x18] sm:$0xf]
    %v1155 = vld [vmem:[#allocation9 + $0x1c] sm:$0xf]
    %v1156 = vld [vmem:[#allocation9 + $0x20] sm:$0xf]
    %v1157 = vld [vmem:[#allocation9 + $0x24] sm:$0xf]
    %v1158 = vld [vmem:[#allocation9 + $0x28] sm:$0xf]
    %v1159 = vld [vmem:[#allocation9 + $0x2c] sm:$0xf]
    %v1160 = vld [vmem:[#allocation9 + $0x30] sm:$0xf]
    %v1161 = vld [vmem:[#allocation9 + $0x34] sm:$0xf]
    %v1162 = vld [vmem:[#allocation9 + $0x38] sm:$0xf]
    %v1163 = vld [vmem:[#allocation9 + $0x3c] sm:$0xf]
    %v1164 = vld [vmem:[#allocation9 + $0x40] sm:$0xf]
    %v1165 = vld [vmem:[#allocation9 + $0x44] sm:$0xf]
    %v1166 = vld [vmem:[#allocation9 + $0x48] sm:$0xf]
    %v1167 = vld [vmem:[#allocation9 + $0x4c] sm:$0xf]
    %v1168 = vld [vmem:[#allocation9 + $0x50] sm:$0xf]
    %v1169 = vld [vmem:[#allocation9 + $0x54] sm:$0xf]
    %v1170 = vld [vmem:[#allocation9 + $0x58] sm:$0xf]
    %v1171 = vld [vmem:[#allocation9 + $0x5c] sm:$0xf]
    %v1172 = vld [vmem:[#allocation9 + $0x60] sm:$0xf]
    %v1173 = vld [vmem:[#allocation9 + $0x64] sm:$0xf]
    %v1174 = vld [vmem:[#allocation9 + $0x68] sm:$0xf]
    %v1175 = vld [vmem:[#allocation9 + $0x6c] sm:$0xf]
    %v1176 = vld [vmem:[#allocation9 + $0x70] sm:$0xf]
    %v1177 = vld [vmem:[#allocation9 + $0x74] sm:$0xf]
    %v1178 = vld [vmem:[#allocation9 + $0x78] sm:$0xf]
    %v1179 = vld [vmem:[#allocation9 + $0x7c] sm:$0xf]
    %v1180 = vld [vmem:[%s6] sm:$0x1]
    %v1182 = vlaneseq
    %v1183 = vshrl.u32 %v1182, 7
    %v1184 = vsub.s32 0, %v1183
    %v1185 = vrot.slane %v1180, %v1184
    %v1219 = vunpack.c.l.b16 %v1148
    %v1220 = vunpack.c.l.b16 %v1149
    %v1221 = vunpack.c.l.b16 %v1150
    %v1222 = vunpack.c.l.b16 %v1151
    %v1223 = vunpack.c.l.b16 %v1152
    %v1224 = vunpack.c.l.b16 %v1153
    %v1225 = vunpack.c.l.b16 %v1154
    %v1226 = vunpack.c.l.b16 %v1155
    %v1227 = vunpack.c.l.b16 %v1156
    %v1228 = vunpack.c.l.b16 %v1157
    %v1229 = vunpack.c.l.b16 %v1158
    %v1230 = vunpack.c.l.b16 %v1159
    %v1231 = vunpack.c.l.b16 %v1160
    %v1232 = vunpack.c.l.b16 %v1161
    %v1233 = vunpack.c.l.b16 %v1162
    %v1234 = vunpack.c.l.b16 %v1163
    %v1235 = vunpack.c.l.b16 %v1164
    %v1236 = vunpack.c.l.b16 %v1165
    %v1237 = vunpack.c.l.b16 %v1166
    %v1238 = vunpack.c.l.b16 %v1167
    %v1239 = vunpack.c.l.b16 %v1168
    %v1240 = vunpack.c.l.b16 %v1169
    %v1241 = vunpack.c.l.b16 %v1170
    %v1242 = vunpack.c.l.b16 %v1171
    %v1243 = vunpack.c.l.b16 %v1172
    %v1244 = vunpack.c.l.b16 %v1173
    %v1245 = vunpack.c.l.b16 %v1174
    %v1246 = vunpack.c.l.b16 %v1175
    %v1247 = vunpack.c.l.b16 %v1176
    %v1248 = vunpack.c.l.b16 %v1177
    %v1249 = vunpack.c.l.b16 %v1178
    %v1250 = vunpack.c.l.b16 %v1179
    %v1251 = vpack.c.b16 %v1220, %v1219
    %v1252 = vpack.c.b16 %v1222, %v1221
    %v1253 = vpack.c.b16 %v1224, %v1223
    %v1254 = vpack.c.b16 %v1226, %v1225
    %v1255 = vpack.c.b16 %v1228, %v1227
    %v1256 = vpack.c.b16 %v1230, %v1229
    %v1257 = vpack.c.b16 %v1232, %v1231
    %v1258 = vpack.c.b16 %v1234, %v1233
    %v1259 = vpack.c.b16 %v1236, %v1235
    %v1260 = vpack.c.b16 %v1238, %v1237
    %v1261 = vpack.c.b16 %v1240, %v1239
    %v1262 = vpack.c.b16 %v1242, %v1241
    %v1263 = vpack.c.b16 %v1244, %v1243
    %v1264 = vpack.c.b16 %v1246, %v1245
    %v1265 = vpack.c.b16 %v1248, %v1247
    %v1266 = vpack.c.b16 %v1250, %v1249
    %1283 = vmatprep.subr.bf16.mxu0 0
    %1284 = vmatpush1.bf16.msra.mxu0 %v1251
    %1285 = vmatprep.subr.bf16.mxu0 0
    %1286 = vmatpush1.bf16.msra.mxu0 %v1252
    %1287 = vmatprep.subr.bf16.mxu0 0
    %1288 = vmatpush1.bf16.msra.mxu0 %v1253
    %1289 = vmatprep.subr.bf16.mxu0 0
    %1290 = vmatpush1.bf16.msra.mxu0 %v1254
    %1291 = vmatprep.subr.bf16.mxu0 0
    %1292 = vmatpush1.bf16.msra.mxu0 %v1255
    %1293 = vmatprep.subr.bf16.mxu0 0
    %1294 = vmatpush1.bf16.msra.mxu0 %v1256
    %1295 = vmatprep.subr.bf16.mxu0 0
    %1296 = vmatpush1.bf16.msra.mxu0 %v1257
    %1297 = vmatprep.subr.bf16.mxu0 0
    %1298 = vmatpush1.bf16.msra.mxu0 %v1258
    %1299 = vmatprep.subr.bf16.mxu0 0
    %1300 = vmatpush1.bf16.msra.mxu0 %v1259
    %1301 = vmatprep.subr.bf16.mxu0 0
    %1302 = vmatpush1.bf16.msra.mxu0 %v1260
    %1303 = vmatprep.subr.bf16.mxu0 0
    %1304 = vmatpush1.bf16.msra.mxu0 %v1261
    %1305 = vmatprep.subr.bf16.mxu0 0
    %1306 = vmatpush1.bf16.msra.mxu0 %v1262
    %1307 = vmatprep.subr.bf16.mxu0 0
    %1308 = vmatpush1.bf16.msra.mxu0 %v1263
    %1309 = vmatprep.subr.bf16.mxu0 0
    %1310 = vmatpush1.bf16.msra.mxu0 %v1264
    %1311 = vmatprep.subr.bf16.mxu0 0
    %1312 = vmatpush1.bf16.msra.mxu0 %v1265
    %1313 = vmatprep.subr.bf16.mxu0 0
    %1314 = vmatpush1.bf16.msra.mxu0 %v1266
    %1315 = vmatprep.mubr.bf16.mxu0 %v1147
    %1316 = vmatmul.mubr.bf16.gmra.mrb[0].mxu0 %v1146
    %v1317 = vpop.f32.mrb[0].mxu0
    %v1318 = vadd.f32 %v1185, %v1317
    %v1319 = vpop.f32.mrb[0].mxu0
    %v1320 = vpop.f32.mrb[0].mxu0
    %v1321 = vpop.f32.mrb[0].mxu0
    %1322 = vdwg.mxu0
    %v1323 = vmax.f32 %v1318, 0.0
    %v1324 = vpack.c.bf16 %v1323, %v1323
    %v1325 = vld [vmem:[#allocation11] sm:$0xf]
    %v1326 = vld [vmem:[#allocation11 + $0x4] sm:$0xf]
    %v1327 = vld [vmem:[#allocation11 + $0x8] sm:$0xf]
    %v1328 = vld [vmem:[#allocation11 + $0xc] sm:$0xf]
    %v1329 = vld [vmem:[#allocation11 + $0x10] sm:$0xf]
    %v1330 = vld [vmem:[#allocation11 + $0x14] sm:$0xf]
    %v1331 = vld [vmem:[#allocation11 + $0x18] sm:$0xf]
    %v1332 = vld [vmem:[#allocation11 + $0x1c] sm:$0xf]
    %v1333 = vld [vmem:[#allocation11 + $0x20] sm:$0xf]
    %v1334 = vld [vmem:[#allocation11 + $0x24] sm:$0xf]
    %v1335 = vld [vmem:[#allocation11 + $0x28] sm:$0xf]
    %v1336 = vld [vmem:[#allocation11 + $0x2c] sm:$0xf]
    %v1337 = vld [vmem:[#allocation11 + $0x30] sm:$0xf]
    %v1338 = vld [vmem:[#allocation11 + $0x34] sm:$0xf]
    %v1339 = vld [vmem:[#allocation11 + $0x38] sm:$0xf]
    %v1340 = vld [vmem:[#allocation11 + $0x3c] sm:$0xf]
    %v1341 = vld [vmem:[%s8] sm:$0x1]
    %v1343 = vlaneseq
    %v1344 = vshrl.u32 %v1343, 7
    %v1345 = vsub.s32 0, %v1344
    %v1346 = vrot.slane %v1341, %v1345
    %v1364 = vunpack.c.l.b16 %v1325
    %v1365 = vunpack.c.l.b16 %v1326
    %v1366 = vunpack.c.l.b16 %v1327
    %v1367 = vunpack.c.l.b16 %v1328
    %v1368 = vunpack.c.l.b16 %v1329
    %v1369 = vunpack.c.l.b16 %v1330
    %v1370 = vunpack.c.l.b16 %v1331
    %v1371 = vunpack.c.l.b16 %v1332
    %v1372 = vunpack.c.l.b16 %v1333
    %v1373 = vunpack.c.l.b16 %v1334
    %v1374 = vunpack.c.l.b16 %v1335
    %v1375 = vunpack.c.l.b16 %v1336
    %v1376 = vunpack.c.l.b16 %v1337
    %v1377 = vunpack.c.l.b16 %v1338
    %v1378 = vunpack.c.l.b16 %v1339
    %v1379 = vunpack.c.l.b16 %v1340
    %v1380 = vpack.c.b16 %v1365, %v1364
    %v1381 = vpack.c.b16 %v1367, %v1366
    %v1382 = vpack.c.b16 %v1369, %v1368
    %v1383 = vpack.c.b16 %v1371, %v1370
    %v1384 = vpack.c.b16 %v1373, %v1372
    %v1385 = vpack.c.b16 %v1375, %v1374
    %v1386 = vpack.c.b16 %v1377, %v1376
    %v1387 = vpack.c.b16 %v1379, %v1378
    %1396 = vmatprep.subr.bf16.mxu0 0
    %1397 = vmatpush1.bf16.msra.mxu0 %v1380
    %1398 = vmatprep.subr.bf16.mxu0 0
    %1399 = vmatpush1.bf16.msra.mxu0 %v1381
    %1400 = vmatprep.subr.bf16.mxu0 0
    %1401 = vmatpush1.bf16.msra.mxu0 %v1382
    %1402 = vmatprep.subr.bf16.mxu0 0
    %1403 = vmatpush1.bf16.msra.mxu0 %v1383
    %1404 = vmatprep.subr.bf16.mxu0 0
    %1405 = vmatpush1.bf16.msra.mxu0 %v1384
    %1406 = vmatprep.subr.bf16.mxu0 0
    %1407 = vmatpush1.bf16.msra.mxu0 %v1385
    %1408 = vmatprep.subr.bf16.mxu0 0
    %1409 = vmatpush1.bf16.msra.mxu0 %v1386
    %1410 = vmatprep.subr.bf16.mxu0 0
    %1411 = vmatpush1.bf16.msra.mxu0 %v1387
    %1412 = vmatprep.subr.bf16.mxu0 0
    %1413 = vmatpush1.bf16.msra.mxu0 0
    %1414 = vmatprep.subr.bf16.mxu0 0
    %1415 = vmatpush1.bf16.msra.mxu0 0
    %1416 = vmatprep.subr.bf16.mxu0 0
    %1417 = vmatpush1.bf16.msra.mxu0 0
    %1418 = vmatprep.subr.bf16.mxu0 0
    %1419 = vmatpush1.bf16.msra.mxu0 0
    %1420 = vmatprep.subr.bf16.mxu0 0
    %1421 = vmatpush1.bf16.msra.mxu0 0
    %1422 = vmatprep.subr.bf16.mxu0 0
    %1423 = vmatpush1.bf16.msra.mxu0 0
    %1424 = vmatprep.subr.bf16.mxu0 0
    %1425 = vmatpush1.bf16.msra.mxu0 0
    %1426 = vmatprep.subr.bf16.mxu0 0
    %1427 = vmatpush1.bf16.msra.mxu0 0
    %1428 = vmatprep.mubr.bf16.mxu0 0
    %1429 = vmatmul.mubr.bf16.gmra.mrb[0].mxu0 %v1324
    %v1430 = vpop.f32.mrb[0].mxu0
    %v1431 = vadd.f32 %v1346, %v1430
    %v1432 = vpop.f32.mrb[0].mxu0
    %v1433 = vpop.f32.mrb[0].mxu0
    %v1434 = vpop.f32.mrb[0].mxu0
    %1435 = vdwg.mxu0
    %1436 = vst [vmem:[#allocation12] sm:$0x3] %v1431
    %v1437 = vld [vmem:[#allocation12] sm:$0x3]
    %v1438 = vmul.f32 %v1437, %v326
    %v1439 = vadd.f32 %v1438, %v163
    %1440 = vst.msk [vmem:[#allocation12] sm:$0x3] %vm329, %v1439
    %v1441 = vld [vmem:[#allocation12] sm:$0x3]
    %1443 = vrot.lane.b32.xlu0 %v326, 4
    %v1444 = vpop.permute.xlu0 %1443
    %v1446 = vmul.f32 %v1441, %v1444
    %v1447 = vadd.f32 %v1446, %v169
    %1448 = vst.msk [vmem:[#allocation12] sm:$0x3] %vm338, %v1447
    %v1449 = vld [vmem:[#allocation12] sm:$0x3]
    %1450 = vrot.lane.b32.xlu0 %v326, 8
    %v1451 = vpop.permute.xlu0 %1450
    %v1453 = vmul.f32 %v1449, %v1451
    %v1454 = vadd.f32 %v1453, %v179
    %1455 = vst.msk [vmem:[#allocation12] sm:$0x3] %vm346, %v1454
    %v1456 = vld [vmem:[#allocation12] sm:$0x3]
    %1457 = vrot.lane.b32.xlu0 %v326, 12
    %v1458 = vpop.permute.xlu0 %1457
    %v1460 = vmul.f32 %v1456, %v1458
    %v1461 = vadd.f32 %v1460, %v189
    %1462 = vst.msk [vmem:[#allocation12] sm:$0x3] %vm354, %v1461
    %v1463 = vld [vmem:[#allocation12] sm:$0x3]
    %1464 = vrot.lane.b32.xlu0 %v326, 16
    %v1465 = vpop.permute.xlu0 %1464
    %v1467 = vmul.f32 %v1463, %v1465
    %v1468 = vadd.f32 %v1467, %v199
    %1469 = vst.msk [vmem:[#allocation12] sm:$0x3] %vm362, %v1468
    %v1470 = vld [vmem:[#allocation12] sm:$0x3]
    %1471 = vrot.lane.b32.xlu0 %v326, 20
    %v1472 = vpop.permute.xlu0 %1471
    %v1474 = vmul.f32 %v1470, %v1472
    %v1475 = vadd.f32 %v1474, %v209
    %1476 = vst.msk [vmem:[#allocation12] sm:$0x3] %vm370, %v1475
    %v1477 = vld [vmem:[#allocation12] sm:$0x3]
    %1478 = vrot.lane.b32.xlu0 %v326, 24
    %v1479 = vpop.permute.xlu0 %1478
    %v1481 = vmul.f32 %v1477, %v1479
    %v1482 = vadd.f32 %v1481, %v219
    %1483 = vst.msk [vmem:[#allocation12] sm:$0x3] %vm378, %v1482
    %v1484 = vld [vmem:[#allocation12] sm:$0x3]
    %1485 = vrot.lane.b32.xlu0 %v326, 28
    %v1486 = vpop.permute.xlu0 %1485
    %v1488 = vmul.f32 %v1484, %v1486
    %v1489 = vadd.f32 %v1488, %v229
    %1490 = vst.msk [vmem:[#allocation12] sm:$0x3] %vm386, %v1489
    // Predicated region
    $region58: #{tpu_custom_call.1} parent=1 // pred_check
      _
    $region59: #{tpu_custom_call.1} parent=1 // pred_check_branch
      %1492 = sbr.rel (0) target = $region61
    $region60: #{tpu_custom_call.1} parent=1 // pred_region
      %s1494 = ssub.s32 32, 32
      %1495 = vsyncadd [#allocation5], %s1494
      %s1497 = sshll.u32 [#allocation12], 4
      %s1498 = int_to_ptr.vmem [resolvable:$true] %s1497
      %1500 = dma.vmem_to_hbm [thread:$0]  %s1498, 32, %s9, [#allocation5]
    $region61: #{tpu_custom_call.1} parent=1 // pred_fallthru
      _
    // Predicated region
    $region62: #{tpu_custom_call.1} parent=1 // pred_check
      _
    $region63: #{tpu_custom_call.1} parent=1 // pred_check_branch
      %1502 = sbr.rel (0) target = $region65
    $region64: #{tpu_custom_call.1} parent=1 // pred_region
      %1503 = dma.done [#allocation5], 32
    $region65: #{tpu_custom_call.1} parent=1 // pred_fallthru
      _
    %1504 = vsyncpa [#allocation4], 1
    %1505 = vsyncpa [#allocation7], 1
    %1506 = vsyncpa [#allocation10], 1
    %1507 = vsyncpa [#allocation5], 1

</llo_original>
